<compile_context>
chip_gen: v5e
topology: v5e:2x2
jax: 0.10.0
libtpu: 0.0.40
codegen_flags: <defaults>
</compile_context>

<pallas_src>
import math

import jax
import jax.numpy as jnp
import numpy as np
from jax import lax
from jax.experimental import pallas as pl
from jax.experimental.pallas import tpu as pltpu


_RU_DILATIONS = (1, 3, 9)
_PAD = 32  # left/right halo rows in the padded-activation scratch (>= 27 = 3*max dilation)


def _elu(x):
    # ELU(alpha=1); exp(min(x, 0)) avoids spurious overflow for large positive x.
    return jnp.where(x > 0, x, jnp.exp(jnp.minimum(x, 0.0)) - 1.0)


# ------------------------------ fused kernel ------------------------------- #

def _make_decoder_block_kernel(L_up, L_out, Kt, Cin, Cout, compute_dtype):
    cdt = compute_dtype
    f32 = jnp.float32

    def kernel(up_ref, wt_ref, bt_ref, w7_ref, b7_ref, w1_ref, b1_ref, o_ref,
               apad_ref):
        # Zero the padded-activation staging buffer; its halo rows stay zero and
        # provide the convs' zero padding for every residual unit.
        apad_ref[...] = jnp.zeros((L_out + 2 * _PAD, Cout), cdt)

        # --- ELU + ConvTranspose1d(kernel=Kt, stride, padding=ceil(stride/2)) ---
        # Lowered to a valid conv over the zero-inserted input with flipped,
        # io-swapped taps; single im2col matmul (contraction depth Kt*Cin).
        ua = _elu(up_ref[0].astype(f32)).astype(cdt)                   # (L_up, Cin)
        cols_t = jnp.concatenate([ua[k:k + L_out, :] for k in range(Kt)],
                                 axis=1)                               # (L_out, Kt*Cin)
        h = jnp.dot(cols_t, wt_ref[...],
                    preferred_element_type=f32) + bt_ref[...]          # (L_out, Cout) f32

        # --- 3 ResidualUnits (dilations 1, 3, 9); h stays resident in VMEM ---
        for i, d in enumerate(_RU_DILATIONS):
            res = h
            # ELU(h) into the zero-edged scratch (aligned offset _PAD).
            apad_ref[_PAD:_PAD + L_out, :] = _elu(h).astype(cdt)
            ap = apad_ref[...]                                         # (L_out+2*_PAD, Cout)
            # im2col of the k=7 dilated conv: one (L_out, 7*Cout) @ (7*Cout, Cout) matmul.
            cols = jnp.concatenate(
                [ap[_PAD - 3 * d + k * d: _PAD - 3 * d + k * d + L_out, :]
                 for k in range(7)], axis=1)
            c7 = jnp.dot(cols, w7_ref[i],
                         preferred_element_type=f32) + b7_ref[i]       # (L_out, Cout) f32
            # ELU + k=1 conv + residual add (all adds in f32).
            h = jnp.dot(_elu(c7).astype(cdt), w1_ref[i],
                        preferred_element_type=f32) + b1_ref[i] + res

        o_ref[0] = h.astype(o_ref.dtype)

    return kernel


# ------------------------------ public wrapper ------------------------------ #

def decoder_block_pallas(x_ncl, params, stride, compute_dtype=jnp.bfloat16):
    """x_ncl: (B, Cin, L) — PyTorch NCL layout.  Returns (B, Cout, L_out) f32."""
    S = stride
    x = jnp.transpose(x_ncl, (0, 2, 1)).astype(jnp.float32)            # (B, L, Cin)
    B, L, Cin = x.shape

    Wt = params["tconv_w"]                                             # (Cin, Cout, Kt)
    Cin_w, Cout, Kt = Wt.shape
    assert Cin_w == Cin and Kt == 2 * S
    P = math.ceil(S / 2)
    conv_pad = Kt - 1 - P
    L_out = (L - 1) * S + Kt - 2 * P
    L_up = L_out + Kt - 1

    # Zero-insertion (stride) + symmetric conv padding, done once in HBM on the
    # small pre-upsample tensor; ELU is applied in-kernel (ELU(0) = 0).
    up = jnp.zeros((B, L_up, Cin), jnp.float32)
    up = up.at[:, conv_pad:conv_pad + (L - 1) * S + 1:S, :].set(x)

    # ---- pack weights (weight-norm already baked into the tensors) ----
    cdt = compute_dtype
    # transposed conv -> flipped + io-swapped -> im2col layout (Kt*Cin, Cout)
    wt_mat = (jnp.transpose(jnp.flip(Wt, axis=-1), (2, 0, 1))
              .reshape(Kt * Cin, Cout).astype(cdt))
    bt = params["tconv_b"].reshape(1, Cout).astype(jnp.float32)
    names = ("ru1", "ru2", "ru3")
    w7 = jnp.stack([jnp.transpose(params[f"{n}_w7"], (2, 1, 0)).reshape(7 * Cout, Cout)
                    for n in names]).astype(cdt)                       # (3, 7*Cout, Cout)
    b7 = jnp.stack([params[f"{n}_b7"].reshape(1, Cout)
                    for n in names]).astype(jnp.float32)               # (3, 1, Cout)
    w1 = jnp.stack([jnp.transpose(params[f"{n}_w1"], (2, 1, 0)).reshape(Cout, Cout)
                    for n in names]).astype(cdt)                       # (3, Cout, Cout)
    b1 = jnp.stack([params[f"{n}_b1"].reshape(1, Cout)
                    for n in names]).astype(jnp.float32)               # (3, 1, Cout)

    kernel = _make_decoder_block_kernel(L_up, L_out, Kt, Cin, Cout, cdt)

    out = pl.pallas_call(
        kernel,
        out_shape=jax.ShapeDtypeStruct((B, L_out, Cout), jnp.float32),
        grid=(B,),
        in_specs=[
            pl.BlockSpec((1, L_up, Cin), lambda b: (b, 0, 0)),          # per-batch input
            pl.BlockSpec((Kt * Cin, Cout), lambda b: (0, 0)),           # tconv weight
            pl.BlockSpec((1, Cout), lambda b: (0, 0)),                  # tconv bias
            pl.BlockSpec((3, 7 * Cout, Cout), lambda b: (0, 0, 0)),     # RU k=7 weights
            pl.BlockSpec((3, 1, Cout), lambda b: (0, 0, 0)),            # RU k=7 biases
            pl.BlockSpec((3, Cout, Cout), lambda b: (0, 0, 0)),         # RU k=1 weights
            pl.BlockSpec((3, 1, Cout), lambda b: (0, 0, 0)),            # RU k=1 biases
        ],
        out_specs=pl.BlockSpec((1, L_out, Cout), lambda b: (b, 0, 0)),
        scratch_shapes=[pltpu.VMEM((L_out + 2 * _PAD, Cout), cdt)],
        compiler_params=pltpu.CompilerParams(dimension_semantics=("parallel",)),
    )(up, wt_mat, bt, w7, b7, w1, b1)

    return jnp.transpose(out, (0, 2, 1))                               # (B, Cout, L_out)


# ------------------------- parameter construction ------------------------- #

def _wn_weight(key, shape):
    """torch weight_norm(dim=0): w = g * v / ||v|| (norm over all dims but 0)."""
    kv, kg = jax.random.split(key)
    v = 0.2 * jax.random.normal(kv, shape, dtype=jnp.float32)
    g = 1.0 + 0.1 * jax.random.normal(kg, (shape[0],), dtype=jnp.float32)
    norm = jnp.sqrt(jnp.sum(v * v, axis=tuple(range(1, v.ndim)), keepdims=True))
    return v * (g.reshape((-1,) + (1,) * (v.ndim - 1)) / norm)


def init_decoder_block_params(key, in_channels, out_channels, stride):
    ks = jax.random.split(key, 16)
    Kt = 2 * stride
    p = {}
    # WNConvTranspose1d: torch weight layout (Cin, Cout, Kt)
    p["tconv_w"] = _wn_weight(ks[0], (in_channels, out_channels, Kt))
    p["tconv_b"] = 0.1 * jax.random.normal(ks[1], (out_channels,), dtype=jnp.float32)
    # 3 ResidualUnits, each: WNConv1d(k=7, dilation d) + WNConv1d(k=1)
    for i, name in enumerate(("ru1", "ru2", "ru3")):
        base = 2 + 4 * i
        p[f"{name}_w7"] = _wn_weight(ks[base + 0], (out_channels, out_channels, 7))
        p[f"{name}_b7"] = 0.1 * jax.random.normal(ks[base + 1], (out_channels,), dtype=jnp.float32)
        p[f"{name}_w1"] = _wn_weight(ks[base + 2], (out_channels, out_channels, 1))
        p[f"{name}_b1"] = 0.1 * jax.random.normal(ks[base + 3], (out_channels,), dtype=jnp.float32)
    return p


# --------------------------- pure-JAX reference ---------------------------- #

def decoder_block_ref(x, params, stride, compute_dtype=jnp.float32):
    """lax-conv reference; compute_dtype controls the matmul operand precision
    (f32 accumulation either way), mirroring the Pallas kernel's MXU casts."""
    f32 = jnp.float32
    cdt = compute_dtype

    def conv(h, w, b, dilation, padding):
        y = lax.conv_general_dilated(
            h.astype(cdt), w.astype(cdt), (1,), [(padding, padding)],
            rhs_dilation=(dilation,), dimension_numbers=("NCH", "OIH", "NCH"),
            preferred_element_type=f32, precision=lax.Precision.HIGHEST)
        return y + b[None, :, None]

    def tconv(h, w, b, stride, padding):
        K = w.shape[-1]
        wf = jnp.transpose(jnp.flip(w, -1), (1, 0, 2))                 # (Cout, Cin, K)
        y = lax.conv_general_dilated(
            h.astype(cdt), wf.astype(cdt), (1,),
            [(K - 1 - padding, K - 1 - padding)], lhs_dilation=(stride,),
            dimension_numbers=("NCH", "OIH", "NCH"),
            preferred_element_type=f32, precision=lax.Precision.HIGHEST)
        return y + b[None, :, None]

    h = tconv(_elu(x.astype(f32)), params["tconv_w"], params["tconv_b"],
              stride, math.ceil(stride / 2))
    for d, name in zip(_RU_DILATIONS, ("ru1", "ru2", "ru3")):
        res = h
        h = conv(_elu(h), params[f"{name}_w7"], params[f"{name}_b7"], d, d * 3)
        h = conv(_elu(h), params[f"{name}_w1"], params[f"{name}_b1"], 1, 0)
        h = h + res
    return h


# ---------------------------------- main ----------------------------------- #

if __name__ == "__main__":
    key = jax.random.PRNGKey(0)
    k_x, k_p = jax.random.split(key)

    B, Cin, Cout, L, stride = 2, 16, 16, 16, 2
    x = jax.random.normal(k_x, (B, Cin, L), dtype=jnp.float32)
    params = init_decoder_block_params(k_p, Cin, Cout, stride)

    L_out = (L - 1) * stride + 2 * stride - 2 * math.ceil(stride / 2)

    # Run the fused Pallas kernel (bf16 MXU operands, f32 accumulation).
    out = jax.block_until_ready(decoder_block_pallas(x, params, stride))
    assert out.shape == (B, Cout, L_out)

    # Check 1: against a reference using the same bf16 operand precision (tight).
    ref_bf16 = jax.block_until_ready(
        decoder_block_ref(x, params, stride, compute_dtype=jnp.bfloat16))
    np.testing.assert_allclose(np.asarray(out), np.asarray(ref_bf16),
                               rtol=5e-3, atol=5e-3)

    # Check 2: against the full-f32 module semantics (bf16 quantization slack).
    ref_f32 = jax.block_until_ready(
        decoder_block_ref(x, params, stride, compute_dtype=jnp.float32))
    assert ref_f32.shape == out.shape
    np.testing.assert_allclose(np.asarray(out), np.asarray(ref_f32),
                               rtol=5e-2, atol=5e-2)

    print("KERNEL_OK")
</pallas_src>

<mosaic_0001>
module attributes {stable_mosaic.version = 11 : i64} {
  func.func @kernel(%arg0: i32, %arg1: memref<1x35x16xf32, #tpu.memory_space<vmem>>, %arg2: memref<64x16xbf16, #tpu.memory_space<vmem>>, %arg3: memref<1x16xf32, #tpu.memory_space<vmem>>, %arg4: memref<3x112x16xbf16, #tpu.memory_space<vmem>>, %arg5: memref<3x1x16xf32, #tpu.memory_space<vmem>>, %arg6: memref<3x16x16xbf16, #tpu.memory_space<vmem>>, %arg7: memref<3x1x16xf32, #tpu.memory_space<vmem>>, %arg8: memref<1x32x16xf32, #tpu.memory_space<vmem>>, %arg9: memref<96x16xbf16, #tpu.memory_space<vmem>>) attributes {dimension_semantics = [#tpu.dimension_semantics<parallel>], iteration_bounds = array<i64: 2>, scalar_prefetch = 0 : i64, scratch_operands = 1 : i64, tpu.core_type = #tpu.core_type<tc>, window_params = [{transform_indices = @transform_0, window_bounds = array<i64: 1, 35, 16>}, {pipeline_mode = #tpu.pipeline_mode<synchronous>, transform_indices = @transform_1, window_bounds = array<i64: 64, 16>}, {pipeline_mode = #tpu.pipeline_mode<synchronous>, transform_indices = @transform_2, window_bounds = array<i64: 1, 16>}, {pipeline_mode = #tpu.pipeline_mode<synchronous>, transform_indices = @transform_3, window_bounds = array<i64: 3, 112, 16>}, {pipeline_mode = #tpu.pipeline_mode<synchronous>, transform_indices = @transform_4, window_bounds = array<i64: 3, 1, 16>}, {pipeline_mode = #tpu.pipeline_mode<synchronous>, transform_indices = @transform_5, window_bounds = array<i64: 3, 16, 16>}, {pipeline_mode = #tpu.pipeline_mode<synchronous>, transform_indices = @transform_6, window_bounds = array<i64: 3, 1, 16>}, {transform_indices = @transform_7, window_bounds = array<i64: 1, 32, 16>}]} {
    %cst = arith.constant 0.000000e+00 : bf16
    %0 = vector.broadcast %cst : bf16 to vector<96x16xbf16>
    %c0 = arith.constant 0 : index
    %c0_0 = arith.constant 0 : index
    %1 = vector.load %arg9[%c0, %c0_0] : memref<96x16xbf16, #tpu.memory_space<vmem>>, vector<96x16xbf16>
    tpu.vector_store %arg9[%c0, %c0_0], %0 {strides = array<i32>} : memref<96x16xbf16, #tpu.memory_space<vmem>>, vector<96x16xbf16>,
    %c0_1 = arith.constant 0 : index
    %c0_2 = arith.constant 0 : index
    %c0_3 = arith.constant 0 : index
    %2 = vector.load %arg1[%c0_1, %c0_2, %c0_3] : memref<1x35x16xf32, #tpu.memory_space<vmem>>, vector<1x35x16xf32>
    %3 = vector.shape_cast %2 : vector<1x35x16xf32> to vector<35x16xf32>
    %cst_4 = arith.constant 0.000000e+00 : f32
    %4 = vector.broadcast %cst_4 : f32 to vector<35x16xf32>
    %5 = arith.cmpf ogt, %3, %4 : vector<35x16xf32>
    %cst_5 = arith.constant 0.000000e+00 : f32
    %6 = vector.broadcast %cst_5 : f32 to vector<35x16xf32>
    %7 = arith.minimumf %3, %6 : vector<35x16xf32>
    %8 = math.exp %7 : vector<35x16xf32>
    %cst_6 = arith.constant 1.000000e+00 : f32
    %9 = vector.broadcast %cst_6 : f32 to vector<35x16xf32>
    %10 = arith.subf %8, %9 : vector<35x16xf32>
    %11 = arith.select %5, %3, %10 : vector<35x16xi1>, vector<35x16xf32>
    %12 = arith.truncf %11 : vector<35x16xf32> to vector<35x16xbf16>
    %13 = vector.extract_strided_slice %12 {offsets = [0, 0], sizes = [32, 16], strides = [1, 1]} : vector<35x16xbf16> to vector<32x16xbf16>
    %14 = vector.extract_strided_slice %12 {offsets = [1, 0], sizes = [32, 16], strides = [1, 1]} : vector<35x16xbf16> to vector<32x16xbf16>
    %15 = vector.extract_strided_slice %12 {offsets = [2, 0], sizes = [32, 16], strides = [1, 1]} : vector<35x16xbf16> to vector<32x16xbf16>
    %16 = vector.extract_strided_slice %12 {offsets = [3, 0], sizes = [32, 16], strides = [1, 1]} : vector<35x16xbf16> to vector<32x16xbf16>
    %17 = tpu.concatenate %13, %14, %15, %16 in 1 : vector<32x16xbf16>, vector<32x16xbf16>, vector<32x16xbf16>, vector<32x16xbf16> -> vector<32x64xbf16>
    %c0_7 = arith.constant 0 : index
    %c0_8 = arith.constant 0 : index
    %18 = vector.load %arg2[%c0_7, %c0_8] : memref<64x16xbf16, #tpu.memory_space<vmem>>, vector<64x16xbf16>
    %cst_9 = arith.constant dense<0.000000e+00> : vector<32x16xf32>
    %19 = tpu.matmul %17, %18, %cst_9 {dimension_numbers = #tpu.dot_dimension_numbers<[1], [0], [0], [1], [0, 0, 1, 1], [], []>} : vector<32x64xbf16>, vector<64x16xbf16>, vector<32x16xf32> -> vector<32x16xf32>
    %c0_10 = arith.constant 0 : index
    %c0_11 = arith.constant 0 : index
    %20 = vector.load %arg3[%c0_10, %c0_11] : memref<1x16xf32, #tpu.memory_space<vmem>>, vector<1x16xf32>
    %21 = vector.broadcast %20 : vector<1x16xf32> to vector<32x16xf32>
    %22 = arith.addf %19, %21 : vector<32x16xf32>
    %cst_12 = arith.constant 0.000000e+00 : f32
    %23 = vector.broadcast %cst_12 : f32 to vector<32x16xf32>
    %24 = arith.cmpf ogt, %22, %23 : vector<32x16xf32>
    %cst_13 = arith.constant 0.000000e+00 : f32
    %25 = vector.broadcast %cst_13 : f32 to vector<32x16xf32>
    %26 = arith.minimumf %22, %25 : vector<32x16xf32>
    %27 = math.exp %26 : vector<32x16xf32>
    %cst_14 = arith.constant 1.000000e+00 : f32
    %28 = vector.broadcast %cst_14 : f32 to vector<32x16xf32>
    %29 = arith.subf %27, %28 : vector<32x16xf32>
    %30 = arith.select %24, %22, %29 : vector<32x16xi1>, vector<32x16xf32>
    %31 = arith.truncf %30 : vector<32x16xf32> to vector<32x16xbf16>
    %c32 = arith.constant 32 : index
    %c0_15 = arith.constant 0 : index
    %32 = vector.load %arg9[%c32, %c0_15] : memref<96x16xbf16, #tpu.memory_space<vmem>>, vector<32x16xbf16>
    tpu.vector_store %arg9[%c32, %c0_15], %31 {strides = array<i32>} : memref<96x16xbf16, #tpu.memory_space<vmem>>, vector<32x16xbf16>,
    %c0_16 = arith.constant 0 : index
    %c0_17 = arith.constant 0 : index
    %33 = vector.load %arg9[%c0_16, %c0_17] : memref<96x16xbf16, #tpu.memory_space<vmem>>, vector<96x16xbf16>
    %34 = vector.extract_strided_slice %33 {offsets = [29, 0], sizes = [32, 16], strides = [1, 1]} : vector<96x16xbf16> to vector<32x16xbf16>
    %35 = vector.extract_strided_slice %33 {offsets = [30, 0], sizes = [32, 16], strides = [1, 1]} : vector<96x16xbf16> to vector<32x16xbf16>
    %36 = vector.extract_strided_slice %33 {offsets = [31, 0], sizes = [32, 16], strides = [1, 1]} : vector<96x16xbf16> to vector<32x16xbf16>
    %37 = vector.extract_strided_slice %33 {offsets = [32, 0], sizes = [32, 16], strides = [1, 1]} : vector<96x16xbf16> to vector<32x16xbf16>
    %38 = vector.extract_strided_slice %33 {offsets = [33, 0], sizes = [32, 16], strides = [1, 1]} : vector<96x16xbf16> to vector<32x16xbf16>
    %39 = vector.extract_strided_slice %33 {offsets = [34, 0], sizes = [32, 16], strides = [1, 1]} : vector<96x16xbf16> to vector<32x16xbf16>
    %40 = vector.extract_strided_slice %33 {offsets = [35, 0], sizes = [32, 16], strides = [1, 1]} : vector<96x16xbf16> to vector<32x16xbf16>
    %41 = tpu.concatenate %34, %35, %36, %37, %38, %39, %40 in 1 : vector<32x16xbf16>, vector<32x16xbf16>, vector<32x16xbf16>, vector<32x16xbf16>, vector<32x16xbf16>, vector<32x16xbf16>, vector<32x16xbf16> -> vector<32x112xbf16>
    %c0_18 = arith.constant 0 : index
    %c0_19 = arith.constant 0 : index
    %c0_20 = arith.constant 0 : index
    %42 = vector.load %arg4[%c0_18, %c0_19, %c0_20] : memref<3x112x16xbf16, #tpu.memory_space<vmem>>, vector<1x112x16xbf16>
    %43 = vector.shape_cast %42 : vector<1x112x16xbf16> to vector<112x16xbf16>
    %cst_21 = arith.constant dense<0.000000e+00> : vector<32x16xf32>
    %44 = tpu.matmul %41, %43, %cst_21 {dimension_numbers = #tpu.dot_dimension_numbers<[1], [0], [0], [1], [0, 0, 1, 1], [], []>} : vector<32x112xbf16>, vector<112x16xbf16>, vector<32x16xf32> -> vector<32x16xf32>
    %c0_22 = arith.constant 0 : index
    %c0_23 = arith.constant 0 : index
    %c0_24 = arith.constant 0 : index
    %45 = vector.load %arg5[%c0_22, %c0_23, %c0_24] : memref<3x1x16xf32, #tpu.memory_space<vmem>>, vector<1x1x16xf32>
    %46 = vector.shape_cast %45 : vector<1x1x16xf32> to vector<1x16xf32>
    %47 = vector.broadcast %46 : vector<1x16xf32> to vector<32x16xf32>
    %48 = arith.addf %44, %47 : vector<32x16xf32>
    %cst_25 = arith.constant 0.000000e+00 : f32
    %49 = vector.broadcast %cst_25 : f32 to vector<32x16xf32>
    %50 = arith.cmpf ogt, %48, %49 : vector<32x16xf32>
    %cst_26 = arith.constant 0.000000e+00 : f32
    %51 = vector.broadcast %cst_26 : f32 to vector<32x16xf32>
    %52 = arith.minimumf %48, %51 : vector<32x16xf32>
    %53 = math.exp %52 : vector<32x16xf32>
    %cst_27 = arith.constant 1.000000e+00 : f32
    %54 = vector.broadcast %cst_27 : f32 to vector<32x16xf32>
    %55 = arith.subf %53, %54 : vector<32x16xf32>
    %56 = arith.select %50, %48, %55 : vector<32x16xi1>, vector<32x16xf32>
    %57 = arith.truncf %56 : vector<32x16xf32> to vector<32x16xbf16>
    %c0_28 = arith.constant 0 : index
    %c0_29 = arith.constant 0 : index
    %c0_30 = arith.constant 0 : index
    %58 = vector.load %arg6[%c0_28, %c0_29, %c0_30] : memref<3x16x16xbf16, #tpu.memory_space<vmem>>, vector<1x16x16xbf16>
    %59 = vector.shape_cast %58 : vector<1x16x16xbf16> to vector<16x16xbf16>
    %cst_31 = arith.constant dense<0.000000e+00> : vector<32x16xf32>
    %60 = tpu.matmul %57, %59, %cst_31 {dimension_numbers = #tpu.dot_dimension_numbers<[1], [0], [0], [1], [0, 0, 1, 1], [], []>} : vector<32x16xbf16>, vector<16x16xbf16>, vector<32x16xf32> -> vector<32x16xf32>
    %c0_32 = arith.constant 0 : index
    %c0_33 = arith.constant 0 : index
    %c0_34 = arith.constant 0 : index
    %61 = vector.load %arg7[%c0_32, %c0_33, %c0_34] : memref<3x1x16xf32, #tpu.memory_space<vmem>>, vector<1x1x16xf32>
    %62 = vector.shape_cast %61 : vector<1x1x16xf32> to vector<1x16xf32>
    %63 = vector.broadcast %62 : vector<1x16xf32> to vector<32x16xf32>
    %64 = arith.addf %60, %63 : vector<32x16xf32>
    %65 = arith.addf %64, %22 : vector<32x16xf32>
    %cst_35 = arith.constant 0.000000e+00 : f32
    %66 = vector.broadcast %cst_35 : f32 to vector<32x16xf32>
    %67 = arith.cmpf ogt, %65, %66 : vector<32x16xf32>
    %cst_36 = arith.constant 0.000000e+00 : f32
    %68 = vector.broadcast %cst_36 : f32 to vector<32x16xf32>
    %69 = arith.minimumf %65, %68 : vector<32x16xf32>
    %70 = math.exp %69 : vector<32x16xf32>
    %cst_37 = arith.constant 1.000000e+00 : f32
    %71 = vector.broadcast %cst_37 : f32 to vector<32x16xf32>
    %72 = arith.subf %70, %71 : vector<32x16xf32>
    %73 = arith.select %67, %65, %72 : vector<32x16xi1>, vector<32x16xf32>
    %74 = arith.truncf %73 : vector<32x16xf32> to vector<32x16xbf16>
    %c32_38 = arith.constant 32 : index
    %c0_39 = arith.constant 0 : index
    %75 = vector.load %arg9[%c32_38, %c0_39] : memref<96x16xbf16, #tpu.memory_space<vmem>>, vector<32x16xbf16>
    tpu.vector_store %arg9[%c32_38, %c0_39], %74 {strides = array<i32>} : memref<96x16xbf16, #tpu.memory_space<vmem>>, vector<32x16xbf16>,
    %c0_40 = arith.constant 0 : index
    %c0_41 = arith.constant 0 : index
    %76 = vector.load %arg9[%c0_40, %c0_41] : memref<96x16xbf16, #tpu.memory_space<vmem>>, vector<96x16xbf16>
    %77 = vector.extract_strided_slice %76 {offsets = [23, 0], sizes = [32, 16], strides = [1, 1]} : vector<96x16xbf16> to vector<32x16xbf16>
    %78 = vector.extract_strided_slice %76 {offsets = [26, 0], sizes = [32, 16], strides = [1, 1]} : vector<96x16xbf16> to vector<32x16xbf16>
    %79 = vector.extract_strided_slice %76 {offsets = [29, 0], sizes = [32, 16], strides = [1, 1]} : vector<96x16xbf16> to vector<32x16xbf16>
    %80 = vector.extract_strided_slice %76 {offsets = [32, 0], sizes = [32, 16], strides = [1, 1]} : vector<96x16xbf16> to vector<32x16xbf16>
    %81 = vector.extract_strided_slice %76 {offsets = [35, 0], sizes = [32, 16], strides = [1, 1]} : vector<96x16xbf16> to vector<32x16xbf16>
    %82 = vector.extract_strided_slice %76 {offsets = [38, 0], sizes = [32, 16], strides = [1, 1]} : vector<96x16xbf16> to vector<32x16xbf16>
    %83 = vector.extract_strided_slice %76 {offsets = [41, 0], sizes = [32, 16], strides = [1, 1]} : vector<96x16xbf16> to vector<32x16xbf16>
    %84 = tpu.concatenate %77, %78, %79, %80, %81, %82, %83 in 1 : vector<32x16xbf16>, vector<32x16xbf16>, vector<32x16xbf16>, vector<32x16xbf16>, vector<32x16xbf16>, vector<32x16xbf16>, vector<32x16xbf16> -> vector<32x112xbf16>
    %c1 = arith.constant 1 : index
    %c0_42 = arith.constant 0 : index
    %c0_43 = arith.constant 0 : index
    %85 = vector.load %arg4[%c1, %c0_42, %c0_43] : memref<3x112x16xbf16, #tpu.memory_space<vmem>>, vector<1x112x16xbf16>
    %86 = vector.shape_cast %85 : vector<1x112x16xbf16> to vector<112x16xbf16>
    %cst_44 = arith.constant dense<0.000000e+00> : vector<32x16xf32>
    %87 = tpu.matmul %84, %86, %cst_44 {dimension_numbers = #tpu.dot_dimension_numbers<[1], [0], [0], [1], [0, 0, 1, 1], [], []>} : vector<32x112xbf16>, vector<112x16xbf16>, vector<32x16xf32> -> vector<32x16xf32>
    %c1_45 = arith.constant 1 : index
    %c0_46 = arith.constant 0 : index
    %c0_47 = arith.constant 0 : index
    %88 = vector.load %arg5[%c1_45, %c0_46, %c0_47] : memref<3x1x16xf32, #tpu.memory_space<vmem>>, vector<1x1x16xf32>
    %89 = vector.shape_cast %88 : vector<1x1x16xf32> to vector<1x16xf32>
    %90 = vector.broadcast %89 : vector<1x16xf32> to vector<32x16xf32>
    %91 = arith.addf %87, %90 : vector<32x16xf32>
    %cst_48 = arith.constant 0.000000e+00 : f32
    %92 = vector.broadcast %cst_48 : f32 to vector<32x16xf32>
    %93 = arith.cmpf ogt, %91, %92 : vector<32x16xf32>
    %cst_49 = arith.constant 0.000000e+00 : f32
    %94 = vector.broadcast %cst_49 : f32 to vector<32x16xf32>
    %95 = arith.minimumf %91, %94 : vector<32x16xf32>
    %96 = math.exp %95 : vector<32x16xf32>
    %cst_50 = arith.constant 1.000000e+00 : f32
    %97 = vector.broadcast %cst_50 : f32 to vector<32x16xf32>
    %98 = arith.subf %96, %97 : vector<32x16xf32>
    %99 = arith.select %93, %91, %98 : vector<32x16xi1>, vector<32x16xf32>
    %100 = arith.truncf %99 : vector<32x16xf32> to vector<32x16xbf16>
    %c1_51 = arith.constant 1 : index
    %c0_52 = arith.constant 0 : index
    %c0_53 = arith.constant 0 : index
    %101 = vector.load %arg6[%c1_51, %c0_52, %c0_53] : memref<3x16x16xbf16, #tpu.memory_space<vmem>>, vector<1x16x16xbf16>
    %102 = vector.shape_cast %101 : vector<1x16x16xbf16> to vector<16x16xbf16>
    %cst_54 = arith.constant dense<0.000000e+00> : vector<32x16xf32>
    %103 = tpu.matmul %100, %102, %cst_54 {dimension_numbers = #tpu.dot_dimension_numbers<[1], [0], [0], [1], [0, 0, 1, 1], [], []>} : vector<32x16xbf16>, vector<16x16xbf16>, vector<32x16xf32> -> vector<32x16xf32>
    %c1_55 = arith.constant 1 : index
    %c0_56 = arith.constant 0 : index
    %c0_57 = arith.constant 0 : index
    %104 = vector.load %arg7[%c1_55, %c0_56, %c0_57] : memref<3x1x16xf32, #tpu.memory_space<vmem>>, vector<1x1x16xf32>
    %105 = vector.shape_cast %104 : vector<1x1x16xf32> to vector<1x16xf32>
    %106 = vector.broadcast %105 : vector<1x16xf32> to vector<32x16xf32>
    %107 = arith.addf %103, %106 : vector<32x16xf32>
    %108 = arith.addf %107, %65 : vector<32x16xf32>
    %cst_58 = arith.constant 0.000000e+00 : f32
    %109 = vector.broadcast %cst_58 : f32 to vector<32x16xf32>
    %110 = arith.cmpf ogt, %108, %109 : vector<32x16xf32>
    %cst_59 = arith.constant 0.000000e+00 : f32
    %111 = vector.broadcast %cst_59 : f32 to vector<32x16xf32>
    %112 = arith.minimumf %108, %111 : vector<32x16xf32>
    %113 = math.exp %112 : vector<32x16xf32>
    %cst_60 = arith.constant 1.000000e+00 : f32
    %114 = vector.broadcast %cst_60 : f32 to vector<32x16xf32>
    %115 = arith.subf %113, %114 : vector<32x16xf32>
    %116 = arith.select %110, %108, %115 : vector<32x16xi1>, vector<32x16xf32>
    %117 = arith.truncf %116 : vector<32x16xf32> to vector<32x16xbf16>
    %c32_61 = arith.constant 32 : index
    %c0_62 = arith.constant 0 : index
    %118 = vector.load %arg9[%c32_61, %c0_62] : memref<96x16xbf16, #tpu.memory_space<vmem>>, vector<32x16xbf16>
    tpu.vector_store %arg9[%c32_61, %c0_62], %117 {strides = array<i32>} : memref<96x16xbf16, #tpu.memory_space<vmem>>, vector<32x16xbf16>,
    %c0_63 = arith.constant 0 : index
    %c0_64 = arith.constant 0 : index
    %119 = vector.load %arg9[%c0_63, %c0_64] : memref<96x16xbf16, #tpu.memory_space<vmem>>, vector<96x16xbf16>
    %120 = vector.extract_strided_slice %119 {offsets = [5, 0], sizes = [32, 16], strides = [1, 1]} : vector<96x16xbf16> to vector<32x16xbf16>
    %121 = vector.extract_strided_slice %119 {offsets = [14, 0], sizes = [32, 16], strides = [1, 1]} : vector<96x16xbf16> to vector<32x16xbf16>
    %122 = vector.extract_strided_slice %119 {offsets = [23, 0], sizes = [32, 16], strides = [1, 1]} : vector<96x16xbf16> to vector<32x16xbf16>
    %123 = vector.extract_strided_slice %119 {offsets = [32, 0], sizes = [32, 16], strides = [1, 1]} : vector<96x16xbf16> to vector<32x16xbf16>
    %124 = vector.extract_strided_slice %119 {offsets = [41, 0], sizes = [32, 16], strides = [1, 1]} : vector<96x16xbf16> to vector<32x16xbf16>
    %125 = vector.extract_strided_slice %119 {offsets = [50, 0], sizes = [32, 16], strides = [1, 1]} : vector<96x16xbf16> to vector<32x16xbf16>
    %126 = vector.extract_strided_slice %119 {offsets = [59, 0], sizes = [32, 16], strides = [1, 1]} : vector<96x16xbf16> to vector<32x16xbf16>
    %127 = tpu.concatenate %120, %121, %122, %123, %124, %125, %126 in 1 : vector<32x16xbf16>, vector<32x16xbf16>, vector<32x16xbf16>, vector<32x16xbf16>, vector<32x16xbf16>, vector<32x16xbf16>, vector<32x16xbf16> -> vector<32x112xbf16>
    %c2 = arith.constant 2 : index
    %c0_65 = arith.constant 0 : index
    %c0_66 = arith.constant 0 : index
    %128 = vector.load %arg4[%c2, %c0_65, %c0_66] : memref<3x112x16xbf16, #tpu.memory_space<vmem>>, vector<1x112x16xbf16>
    %129 = vector.shape_cast %128 : vector<1x112x16xbf16> to vector<112x16xbf16>
    %cst_67 = arith.constant dense<0.000000e+00> : vector<32x16xf32>
    %130 = tpu.matmul %127, %129, %cst_67 {dimension_numbers = #tpu.dot_dimension_numbers<[1], [0], [0], [1], [0, 0, 1, 1], [], []>} : vector<32x112xbf16>, vector<112x16xbf16>, vector<32x16xf32> -> vector<32x16xf32>
    %c2_68 = arith.constant 2 : index
    %c0_69 = arith.constant 0 : index
    %c0_70 = arith.constant 0 : index
    %131 = vector.load %arg5[%c2_68, %c0_69, %c0_70] : memref<3x1x16xf32, #tpu.memory_space<vmem>>, vector<1x1x16xf32>
    %132 = vector.shape_cast %131 : vector<1x1x16xf32> to vector<1x16xf32>
    %133 = vector.broadcast %132 : vector<1x16xf32> to vector<32x16xf32>
    %134 = arith.addf %130, %133 : vector<32x16xf32>
    %cst_71 = arith.constant 0.000000e+00 : f32
    %135 = vector.broadcast %cst_71 : f32 to vector<32x16xf32>
    %136 = arith.cmpf ogt, %134, %135 : vector<32x16xf32>
    %cst_72 = arith.constant 0.000000e+00 : f32
    %137 = vector.broadcast %cst_72 : f32 to vector<32x16xf32>
    %138 = arith.minimumf %134, %137 : vector<32x16xf32>
    %139 = math.exp %138 : vector<32x16xf32>
    %cst_73 = arith.constant 1.000000e+00 : f32
    %140 = vector.broadcast %cst_73 : f32 to vector<32x16xf32>
    %141 = arith.subf %139, %140 : vector<32x16xf32>
    %142 = arith.select %136, %134, %141 : vector<32x16xi1>, vector<32x16xf32>
    %143 = arith.truncf %142 : vector<32x16xf32> to vector<32x16xbf16>
    %c2_74 = arith.constant 2 : index
    %c0_75 = arith.constant 0 : index
    %c0_76 = arith.constant 0 : index
    %144 = vector.load %arg6[%c2_74, %c0_75, %c0_76] : memref<3x16x16xbf16, #tpu.memory_space<vmem>>, vector<1x16x16xbf16>
    %145 = vector.shape_cast %144 : vector<1x16x16xbf16> to vector<16x16xbf16>
    %cst_77 = arith.constant dense<0.000000e+00> : vector<32x16xf32>
    %146 = tpu.matmul %143, %145, %cst_77 {dimension_numbers = #tpu.dot_dimension_numbers<[1], [0], [0], [1], [0, 0, 1, 1], [], []>} : vector<32x16xbf16>, vector<16x16xbf16>, vector<32x16xf32> -> vector<32x16xf32>
    %c2_78 = arith.constant 2 : index
    %c0_79 = arith.constant 0 : index
    %c0_80 = arith.constant 0 : index
    %147 = vector.load %arg7[%c2_78, %c0_79, %c0_80] : memref<3x1x16xf32, #tpu.memory_space<vmem>>, vector<1x1x16xf32>
    %148 = vector.shape_cast %147 : vector<1x1x16xf32> to vector<1x16xf32>
    %149 = vector.broadcast %148 : vector<1x16xf32> to vector<32x16xf32>
    %150 = arith.addf %146, %149 : vector<32x16xf32>
    %151 = arith.addf %150, %108 : vector<32x16xf32>
    %c0_81 = arith.constant 0 : index
    %c0_82 = arith.constant 0 : index
    %c0_83 = arith.constant 0 : index
    %152 = vector.load %arg8[%c0_81, %c0_82, %c0_83] : memref<1x32x16xf32, #tpu.memory_space<vmem>>, vector<1x32x16xf32>
    %153 = vector.shape_cast %152 : vector<1x32x16xf32> to vector<32x16xf32>
    %154 = vector.shape_cast %151 : vector<32x16xf32> to vector<1x32x16xf32>
    tpu.vector_store %arg8[%c0_81, %c0_82, %c0_83], %154 {strides = array<i32>} : memref<1x32x16xf32, #tpu.memory_space<vmem>>, vector<1x32x16xf32>,
    return
  }
  func.func @transform_0(%arg0: i32) -> (i32, i32, i32) {
    %c0_i32 = arith.constant 0 : i32
    %c0_i32_0 = arith.constant 0 : i32
    %c0_i32_1 = arith.constant 0 : i32
    return %arg0, %c0_i32, %c0_i32_0 : i32, i32, i32
  }
  func.func @transform_1(%arg0: i32) -> (i32, i32) {
    %c0_i32 = arith.constant 0 : i32
    %c0_i32_0 = arith.constant 0 : i32
    %c0_i32_1 = arith.constant 0 : i32
    return %c0_i32, %c0_i32_0 : i32, i32
  }
  func.func @transform_2(%arg0: i32) -> (i32, i32) {
    %c0_i32 = arith.constant 0 : i32
    %c0_i32_0 = arith.constant 0 : i32
    %c0_i32_1 = arith.constant 0 : i32
    return %c0_i32, %c0_i32_0 : i32, i32
  }
  func.func @transform_3(%arg0: i32) -> (i32, i32, i32) {
    %c0_i32 = arith.constant 0 : i32
    %c0_i32_0 = arith.constant 0 : i32
    %c0_i32_1 = arith.constant 0 : i32
    %c0_i32_2 = arith.constant 0 : i32
    return %c0_i32, %c0_i32_0, %c0_i32_1 : i32, i32, i32
  }
  func.func @transform_4(%arg0: i32) -> (i32, i32, i32) {
    %c0_i32 = arith.constant 0 : i32
    %c0_i32_0 = arith.constant 0 : i32
    %c0_i32_1 = arith.constant 0 : i32
    %c0_i32_2 = arith.constant 0 : i32
    return %c0_i32, %c0_i32_0, %c0_i32_1 : i32, i32, i32
  }
  func.func @transform_5(%arg0: i32) -> (i32, i32, i32) {
    %c0_i32 = arith.constant 0 : i32
    %c0_i32_0 = arith.constant 0 : i32
    %c0_i32_1 = arith.constant 0 : i32
    %c0_i32_2 = arith.constant 0 : i32
    return %c0_i32, %c0_i32_0, %c0_i32_1 : i32, i32, i32
  }
  func.func @transform_6(%arg0: i32) -> (i32, i32, i32) {
    %c0_i32 = arith.constant 0 : i32
    %c0_i32_0 = arith.constant 0 : i32
    %c0_i32_1 = arith.constant 0 : i32
    %c0_i32_2 = arith.constant 0 : i32
    return %c0_i32, %c0_i32_0, %c0_i32_1 : i32, i32, i32
  }
  func.func @transform_7(%arg0: i32) -> (i32, i32, i32) {
    %c0_i32 = arith.constant 0 : i32
    %c0_i32_0 = arith.constant 0 : i32
    %c0_i32_1 = arith.constant 0 : i32
    return %arg0, %c0_i32, %c0_i32_0 : i32, i32, i32
  }
}

</mosaic_0001>

<llo_original>
// kernel: tpu_custom_call.1
$region0: #{tpu_custom_call.1}
  #allocation0 [shape = 'u32[]', space=smem, size = 0x4, offset = 0x4, fixed_abs, tag = 'smem constant byte address 0x4 - core index']
  #allocation1 [shape = 'u32[72,128]{1,0:T(1,128)}', space=vmem, size = 0x9000, scoped, tag = 'internal scratch']
  #allocation2 [shape = 'bf16[96,16]{1,0:T(8,128)(2,1)}', space=vmem, size = 0x6000, scoped, tag = 'scratch operand']
  %s0 = inlined_call_operand.vmem [shape: f32[2,35,16], index: 0, kind: input, shape index: {}]
  %s1 = inlined_call_operand.vmem [shape: bf16[64,16], index: 1, kind: input, shape index: {}]
  %s2 = inlined_call_operand.vmem [shape: f32[1,16], index: 2, kind: input, shape index: {}]
  %s3 = inlined_call_operand.vmem [shape: bf16[3,112,16], index: 3, kind: input, shape index: {}]
  %s4 = inlined_call_operand.vmem [shape: f32[3,1,16], index: 4, kind: input, shape index: {}]
  %s5 = inlined_call_operand.vmem [shape: bf16[3,16,16], index: 5, kind: input, shape index: {}]
  %s6 = inlined_call_operand.vmem [shape: f32[3,1,16], index: 6, kind: input, shape index: {}]
  %s7 = inlined_call_operand.vmem [shape: f32[2,32,16], index: 7, kind: output, shape index: {}]
  %s8 = sld [smem:[#allocation0]]
  $region61: #{tpu_custom_call.1} parent=0
    _
  %s10 = ssub.s32 1, %s8
  %s11 = scalar_select 0, %s10, %s8
  loop: start=0, step=1, limit=4
  $region2: #{tpu_custom_call.1} parent=0 // loop_pre_header
    _
  $region3: #{tpu_custom_call.1} parent=0 // loop_header
    %s13 = sphi 0, %s17
    %p14 = scmp.ge.s32.totalorder %s13, 4
    %s23 = sphi 0, %s25
    %s26 = sphi 0, %s23
    %s27 = sphi 0, %s26
    %s43 = sphi 0, %s27
    %s47 = sphi 0, %s47
    %s49 = sphi 0, %s47
    %s50 = sphi 0, %s49
    %s64 = sphi 0, %s50
    %s68 = sphi 0, %s68
    %s70 = sphi 0, %s68
    %s71 = sphi 0, %s70
    %s85 = sphi 0, %s71
    %s89 = sphi 0, %s89
    %s91 = sphi 0, %s89
    %s92 = sphi 0, %s91
    %s106 = sphi 0, %s92
    %s110 = sphi 0, %s110
    %s112 = sphi 0, %s110
    %s113 = sphi 0, %s112
    %s127 = sphi 0, %s113
    %s131 = sphi 0, %s131
    %s133 = sphi 0, %s131
    %s134 = sphi 0, %s133
    %s148 = sphi 0, %s134
    %s152 = sphi 0, %s152
    %s154 = sphi 0, %s152
    %s155 = sphi 0, %s154
    %s169 = sphi 0, %s155
    %s175 = sphi 0, %s177
    %s178 = sphi 0, %s175
    %s179 = sphi 0, %s178
    %s195 = sphi 0, %s179
  $region4: #{tpu_custom_call.1} parent=0 // loop_header_branch
    %16 = sbr.rel (%p14) target = $region8
  $region5: #{tpu_custom_call.1} parent=0 // loop_body
    %s18 = ssub.s32 %s13, 1
    %s19 = ssub.s32 %s13, 2
    %s20 = sadd.s32 %s13, 1
    %s21 = ssub.s32 %s13, %s20
    %p22 = scmp.eq.s32.totalorder %s21, 0
    %s24 = sadd.s32 %s23, 1
    %s25 = scalar_select %p22, %s23, %s24
    %p28 = pneg %p22
    %p29 = scmp.eq.s32.totalorder %s13, 1
    %p30 = por %p28, %p29
    %p31 = scmp.ne.s32.totalorder %s23, %s26
    %p32 = scmp.eq.s32.totalorder %s13, 0
    %p33 = por %p31, %p32
    %p34 = scmp.ne.s32.totalorder %s23, %s26
    %p35 = scmp.eq.s32.totalorder %s18, 1
    %p36 = por %p34, %p35
    %p37 = scmp.ne.s32.totalorder %s26, %s27
    %p38 = scmp.eq.s32.totalorder %s18, 0
    %p39 = por %p37, %p38
    %p40 = scmp.ne.s32.totalorder %s26, %s27
    %p41 = scmp.eq.s32.totalorder %s19, 1
    %p42 = por %p40, %p41
    %p44 = scmp.ne.s32.totalorder %s27, %s43
    %p45 = scmp.eq.s32.totalorder %s19, 0
    %p46 = por %p44, %p45
    %s48 = sadd.s32 %s47, 1
    %p51 = scmp.eq.s32.totalorder %s13, 1
    %p52 = scmp.ne.s32.totalorder %s47, %s49
    %p53 = scmp.eq.s32.totalorder %s13, 0
    %p54 = por %p52, %p53
    %p55 = scmp.ne.s32.totalorder %s47, %s49
    %p56 = scmp.eq.s32.totalorder %s18, 1
    %p57 = por %p55, %p56
    %p58 = scmp.ne.s32.totalorder %s49, %s50
    %p59 = scmp.eq.s32.totalorder %s18, 0
    %p60 = por %p58, %p59
    %p61 = scmp.ne.s32.totalorder %s49, %s50
    %p62 = scmp.eq.s32.totalorder %s19, 1
    %p63 = por %p61, %p62
    %p65 = scmp.ne.s32.totalorder %s50, %s64
    %p66 = scmp.eq.s32.totalorder %s19, 0
    %p67 = por %p65, %p66
    %s69 = sadd.s32 %s68, 1
    %p72 = scmp.eq.s32.totalorder %s13, 1
    %p73 = scmp.ne.s32.totalorder %s68, %s70
    %p74 = scmp.eq.s32.totalorder %s13, 0
    %p75 = por %p73, %p74
    %p76 = scmp.ne.s32.totalorder %s68, %s70
    %p77 = scmp.eq.s32.totalorder %s18, 1
    %p78 = por %p76, %p77
    %p79 = scmp.ne.s32.totalorder %s70, %s71
    %p80 = scmp.eq.s32.totalorder %s18, 0
    %p81 = por %p79, %p80
    %p82 = scmp.ne.s32.totalorder %s70, %s71
    %p83 = scmp.eq.s32.totalorder %s19, 1
    %p84 = por %p82, %p83
    %p86 = scmp.ne.s32.totalorder %s71, %s85
    %p87 = scmp.eq.s32.totalorder %s19, 0
    %p88 = por %p86, %p87
    %s90 = sadd.s32 %s89, 1
    %p93 = scmp.eq.s32.totalorder %s13, 1
    %p94 = scmp.ne.s32.totalorder %s89, %s91
    %p95 = scmp.eq.s32.totalorder %s13, 0
    %p96 = por %p94, %p95
    %p97 = scmp.ne.s32.totalorder %s89, %s91
    %p98 = scmp.eq.s32.totalorder %s18, 1
    %p99 = por %p97, %p98
    %p100 = scmp.ne.s32.totalorder %s91, %s92
    %p101 = scmp.eq.s32.totalorder %s18, 0
    %p102 = por %p100, %p101
    %p103 = scmp.ne.s32.totalorder %s91, %s92
    %p104 = scmp.eq.s32.totalorder %s19, 1
    %p105 = por %p103, %p104
    %p107 = scmp.ne.s32.totalorder %s92, %s106
    %p108 = scmp.eq.s32.totalorder %s19, 0
    %p109 = por %p107, %p108
    %s111 = sadd.s32 %s110, 1
    %p114 = scmp.eq.s32.totalorder %s13, 1
    %p115 = scmp.ne.s32.totalorder %s110, %s112
    %p116 = scmp.eq.s32.totalorder %s13, 0
    %p117 = por %p115, %p116
    %p118 = scmp.ne.s32.totalorder %s110, %s112
    %p119 = scmp.eq.s32.totalorder %s18, 1
    %p120 = por %p118, %p119
    %p121 = scmp.ne.s32.totalorder %s112, %s113
    %p122 = scmp.eq.s32.totalorder %s18, 0
    %p123 = por %p121, %p122
    %p124 = scmp.ne.s32.totalorder %s112, %s113
    %p125 = scmp.eq.s32.totalorder %s19, 1
    %p126 = por %p124, %p125
    %p128 = scmp.ne.s32.totalorder %s113, %s127
    %p129 = scmp.eq.s32.totalorder %s19, 0
    %p130 = por %p128, %p129
    %s132 = sadd.s32 %s131, 1
    %p135 = scmp.eq.s32.totalorder %s13, 1
    %p136 = scmp.ne.s32.totalorder %s131, %s133
    %p137 = scmp.eq.s32.totalorder %s13, 0
    %p138 = por %p136, %p137
    %p139 = scmp.ne.s32.totalorder %s131, %s133
    %p140 = scmp.eq.s32.totalorder %s18, 1
    %p141 = por %p139, %p140
    %p142 = scmp.ne.s32.totalorder %s133, %s134
    %p143 = scmp.eq.s32.totalorder %s18, 0
    %p144 = por %p142, %p143
    %p145 = scmp.ne.s32.totalorder %s133, %s134
    %p146 = scmp.eq.s32.totalorder %s19, 1
    %p147 = por %p145, %p146
    %p149 = scmp.ne.s32.totalorder %s134, %s148
    %p150 = scmp.eq.s32.totalorder %s19, 0
    %p151 = por %p149, %p150
    %s153 = sadd.s32 %s152, 1
    %p156 = scmp.eq.s32.totalorder %s13, 1
    %p157 = scmp.ne.s32.totalorder %s152, %s154
    %p158 = scmp.eq.s32.totalorder %s13, 0
    %p159 = por %p157, %p158
    %p160 = scmp.ne.s32.totalorder %s152, %s154
    %p161 = scmp.eq.s32.totalorder %s18, 1
    %p162 = por %p160, %p161
    %p163 = scmp.ne.s32.totalorder %s154, %s155
    %p164 = scmp.eq.s32.totalorder %s18, 0
    %p165 = por %p163, %p164
    %p166 = scmp.ne.s32.totalorder %s154, %s155
    %p167 = scmp.eq.s32.totalorder %s19, 1
    %p168 = por %p166, %p167
    %p170 = scmp.ne.s32.totalorder %s155, %s169
    %p171 = scmp.eq.s32.totalorder %s19, 0
    %p172 = por %p170, %p171
    %s173 = ssub.s32 %s13, %s20
    %p174 = scmp.eq.s32.totalorder %s173, 0
    %s176 = sadd.s32 %s175, 1
    %s177 = scalar_select %p174, %s175, %s176
    %p180 = pneg %p174
    %p181 = scmp.eq.s32.totalorder %s13, 1
    %p182 = por %p180, %p181
    %p183 = scmp.ne.s32.totalorder %s175, %s178
    %p184 = scmp.eq.s32.totalorder %s13, 0
    %p185 = por %p183, %p184
    %p186 = scmp.ne.s32.totalorder %s175, %s178
    %p187 = scmp.eq.s32.totalorder %s18, 1
    %p188 = por %p186, %p187
    %p189 = scmp.ne.s32.totalorder %s178, %s179
    %p190 = scmp.eq.s32.totalorder %s18, 0
    %p191 = por %p189, %p190
    %p192 = scmp.ne.s32.totalorder %s178, %s179
    %p193 = scmp.eq.s32.totalorder %s19, 1
    %p194 = por %p192, %p193
    %p196 = scmp.ne.s32.totalorder %s179, %s195
    %p197 = scmp.eq.s32.totalorder %s19, 0
    %p198 = por %p196, %p197
    %p199 = scmp.le.s32.totalorder 1, %s13
    %p200 = scmp.lt.s32.totalorder %s13, 3
    %p201 = pnand %p199, %p200
    %p202 = pneg %p201
    // Predicated region
    $region9: #{tpu_custom_call.1} parent=5 // pred_check
      _
    $region10: #{tpu_custom_call.1} parent=5 // pred_check_branch
      %204 = sbr.rel (%p201) target = $region12
    $region11: #{tpu_custom_call.1} parent=5 // pred_region
      %s205 = ssub.s32 %s13, 1
      // Predicated region
      $region13: #{tpu_custom_call.1} parent=11 // pred_check
        %p206 = pneg %p60
      $region14: #{tpu_custom_call.1} parent=11 // pred_check_branch
        %208 = sbr.rel (%p206) target = $region16
      $region15: #{tpu_custom_call.1} parent=11 // pred_region
        _
      $region16: #{tpu_custom_call.1} parent=11 // pred_fallthru
        _
      // Predicated region
      $region17: #{tpu_custom_call.1} parent=11 // pred_check
        %p209 = pneg %p81
      $region18: #{tpu_custom_call.1} parent=11 // pred_check_branch
        %211 = sbr.rel (%p209) target = $region20
      $region19: #{tpu_custom_call.1} parent=11 // pred_region
        _
      $region20: #{tpu_custom_call.1} parent=11 // pred_fallthru
        _
      // Predicated region
      $region21: #{tpu_custom_call.1} parent=11 // pred_check
        %p212 = pneg %p102
      $region22: #{tpu_custom_call.1} parent=11 // pred_check_branch
        %214 = sbr.rel (%p212) target = $region24
      $region23: #{tpu_custom_call.1} parent=11 // pred_region
        _
      $region24: #{tpu_custom_call.1} parent=11 // pred_fallthru
        _
      // Predicated region
      $region25: #{tpu_custom_call.1} parent=11 // pred_check
        %p215 = pneg %p123
      $region26: #{tpu_custom_call.1} parent=11 // pred_check_branch
        %217 = sbr.rel (%p215) target = $region28
      $region27: #{tpu_custom_call.1} parent=11 // pred_region
        _
      $region28: #{tpu_custom_call.1} parent=11 // pred_fallthru
        _
      // Predicated region
      $region29: #{tpu_custom_call.1} parent=11 // pred_check
        %p218 = pneg %p144
      $region30: #{tpu_custom_call.1} parent=11 // pred_check_branch
        %220 = sbr.rel (%p218) target = $region32
      $region31: #{tpu_custom_call.1} parent=11 // pred_region
        _
      $region32: #{tpu_custom_call.1} parent=11 // pred_fallthru
        _
      // Predicated region
      $region33: #{tpu_custom_call.1} parent=11 // pred_check
        %p221 = pneg %p165
      $region34: #{tpu_custom_call.1} parent=11 // pred_check_branch
        %223 = sbr.rel (%p221) target = $region36
      $region35: #{tpu_custom_call.1} parent=11 // pred_region
        _
      $region36: #{tpu_custom_call.1} parent=11 // pred_fallthru
        _
    $region12: #{tpu_custom_call.1} parent=5 // pred_fallthru
      _
    %p224 = scmp.lt.s32.totalorder %s13, 2
    // Predicated region
    $region37: #{tpu_custom_call.1} parent=5 // pred_check
      %p225 = pneg %p224
    $region38: #{tpu_custom_call.1} parent=5 // pred_check_branch
      %227 = sbr.rel (%p225) target = $region40
    $region39: #{tpu_custom_call.1} parent=5 // pred_region
      // Predicated region
      $region41: #{tpu_custom_call.1} parent=39 // pred_check
        %p228 = pneg %p33
      $region42: #{tpu_custom_call.1} parent=39 // pred_check_branch
        %230 = sbr.rel (%p228) target = $region44
      $region43: #{tpu_custom_call.1} parent=39 // pred_region
        %p231 = scmp.lt.s32.totalorder %s13, 1
        %s232 = scalar_select %p231, %s13, 1
        %s233 = smul.addr %s232, 5
        %s234 = smul.addr %s233, 8
        %s235 = scalar_lea.vmem %s0, %s234
      $region44: #{tpu_custom_call.1} parent=39 // pred_fallthru
        _
    $region40: #{tpu_custom_call.1} parent=5 // pred_fallthru
      _
    %p236 = scmp.le.s32.totalorder 1, %s13
    %p237 = scmp.lt.s32.totalorder %s13, 3
    %p238 = pnand %p236, %p237
    %p239 = pneg %p238
    // Predicated region
    $region45: #{tpu_custom_call.1} parent=5 // pred_check
      _
    $region46: #{tpu_custom_call.1} parent=5 // pred_check_branch
      %241 = sbr.rel (%p238) target = $region48
    $region47: #{tpu_custom_call.1} parent=5 // pred_region
      %s242 = ssub.s32 %s13, 1
      %p243 = scmp.lt.s32.totalorder %s18, 1
      %s244 = scalar_select %p243, %s18, 1
      %s245 = smul.addr %s244, 5
      %s246 = smul.addr %s245, 8
      %s247 = scalar_lea.vmem %s0, %s246
      %p248 = pneg %p39
      %p249 = pneg %p36
      %p250 = pneg %p60
      %p251 = pneg %p57
      %p252 = pneg %p81
      %p253 = pneg %p78
      %p254 = pneg %p102
      %p255 = pneg %p99
      %p256 = pneg %p123
      %p257 = pneg %p120
      %p258 = pneg %p144
      %p259 = pneg %p141
      %p260 = pneg %p165
      %p261 = pneg %p162
      %p262 = pneg %p191
      %p263 = pneg %p188
      %p264 = scmp.lt.s32.totalorder %s18, 1
      %s265 = scalar_select %p264, %s18, 1
      %s266 = smul.addr %s265, 4
      %s267 = smul.addr %s266, 8
      %s268 = scalar_lea.vmem %s7, %s267
      %p269 = scmp.lt.s32.totalorder %s18, 1
      %s270 = scalar_select %p269, %s18, 1
      %s271 = smul.addr %s270, 5
      %s272 = smul.addr %s271, 8
      %s273 = scalar_lea.vmem %s0, %s272
      %p274 = scmp.lt.s32.totalorder %s18, 1
      %s275 = scalar_select %p274, %s18, 1
      %s276 = smul.addr %s275, 4
      %s277 = smul.addr %s276, 8
      %s278 = scalar_lea.vmem %s7, %s277
      %vm280 = vcmask 125952
      %281 = vst.msk [vmem:[#allocation2] sm:$0xf] %vm280, 0
      %282 = vst.msk [vmem:[#allocation2 + $0x4] sm:$0xf] %vm280, 0
      %283 = vst.msk [vmem:[#allocation2 + $0x8] sm:$0xf] %vm280, 0
      %284 = vst.msk [vmem:[#allocation2 + $0xc] sm:$0xf] %vm280, 0
      %285 = vst.msk [vmem:[#allocation2 + $0x10] sm:$0xf] %vm280, 0
      %286 = vst.msk [vmem:[#allocation2 + $0x14] sm:$0xf] %vm280, 0
      %287 = vst.msk [vmem:[#allocation2 + $0x18] sm:$0xf] %vm280, 0
      %288 = vst.msk [vmem:[#allocation2 + $0x1c] sm:$0xf] %vm280, 0
      %289 = vst.msk [vmem:[#allocation2 + $0x20] sm:$0xf] %vm280, 0
      %290 = vst.msk [vmem:[#allocation2 + $0x24] sm:$0xf] %vm280, 0
      %291 = vst.msk [vmem:[#allocation2 + $0x28] sm:$0xf] %vm280, 0
      %292 = vst.msk [vmem:[#allocation2 + $0x2c] sm:$0xf] %vm280, 0
      %v293 = vld [vmem:[%s273] sm:$0xff]
      %v294 = vld [vmem:[%s273 + $0x8] sm:$0xff]
      %v295 = vld [vmem:[%s273 + $0x10] sm:$0xff]
      %v296 = vld [vmem:[%s273 + $0x18] sm:$0xff]
      %v297 = vld [vmem:[%s273 + $0x20] sm:$0x7]
      %vm298 = vcmp.gt.f32.partialorder %v293, 0.0
      %vm299 = vcmp.gt.f32.partialorder %v294, 0.0
      %vm300 = vcmp.gt.f32.partialorder %v295, 0.0
      %vm301 = vcmp.gt.f32.partialorder %v296, 0.0
      %vm302 = vcmp.gt.f32.partialorder %v297, 0.0
      %v303 = vmin.f32 %v293, 0.0
      %v304 = vmin.f32 %v294, 0.0
      %v305 = vmin.f32 %v295, 0.0
      %v306 = vmin.f32 %v296, 0.0
      %v307 = vmin.f32 %v297, 0.0
      %v308 = vmul.f32 %v303, 1.442695
      %v309 = vpow.pop %v308
      %v310 = vmul.f32 %v304, 1.442695
      %v311 = vpow.pop %v310
      %v312 = vmul.f32 %v305, 1.442695
      %v313 = vpow.pop %v312
      %v314 = vmul.f32 %v306, 1.442695
      %v315 = vpow.pop %v314
      %v316 = vmul.f32 %v307, 1.442695
      %v317 = vpow.pop %v316
      %v318 = vsub.f32 %v309, 1.0
      %v319 = vsub.f32 %v311, 1.0
      %v320 = vsub.f32 %v313, 1.0
      %v321 = vsub.f32 %v315, 1.0
      %v322 = vsub.f32 %v317, 1.0
      %v323 = vsel %vm298, %v293, %v318
      %v324 = vsel %vm299, %v294, %v319
      %v325 = vsel %vm300, %v295, %v320
      %v326 = vsel %vm301, %v296, %v321
      %v327 = vsel %vm302, %v297, %v322
      %v328 = vpack.c.bf16 %v323, %v323
      %v329 = vpack.c.bf16 %v324, %v324
      %v330 = vpack.c.bf16 %v325, %v325
      %v331 = vpack.c.bf16 %v326, %v326
      %v332 = vpack.c.bf16 %v327, %v327
      %v337 = vunpack.c.l.b16 %v328
      %v338 = vunpack.c.l.b16 %v329
      %v339 = vunpack.c.l.b16 %v330
      %v340 = vunpack.c.l.b16 %v331
      %v341 = vpack.c.b16 %v338, %v337
      %v342 = vpack.c.b16 %v340, %v339
      %v344 = vunpack.c.l.b16 %v332
      %v345 = vpack.c.b16 %v344, %v344
      %vm346 = vsmask.f32 7424
      %v348 = vshrl.u32 %v341, 16
      %v350 = vshll.u32 %v341, 16
      %v352 = vrot.slane %v350, 1
      %v353 = vor.u32 %v348, %v352
      %v355 = vshll.u32 %v342, 16
      %v357 = vrot.slane %v355, 1
      %v358 = vsel %vm346, %v353, %v357
      %v359 = vshrl.u32 %v342, 16
      %v361 = vor.u32 %v359, %v357
      %v363 = vshll.u32 %v345, 16
      %v365 = vrot.slane %v363, 1
      %v366 = vsel %vm346, %v361, %v365
      %367 = vrot.lane.b32.xlu0 %v358, 16
      %v368 = vpop.permute.xlu0 %367
      %369 = vrot.lane.b32.xlu0 %v366, 16
      %v370 = vpop.permute.xlu0 %369
      %vm371 = vcmask 1046528
      %v372 = vrot.slane %v341, 1
      %v373 = vrot.slane %v342, 1
      %v374 = vsel %vm371, %v372, %v373
      %v375 = vrot.slane %v345, 1
      %v376 = vsel %vm371, %v373, %v375
      %377 = vrot.lane.b32.xlu0 %v374, 32
      %v378 = vpop.permute.xlu0 %377
      %379 = vrot.lane.b32.xlu0 %v376, 32
      %v380 = vpop.permute.xlu0 %379
      %vm381 = vsmask.f32 6400
      %v382 = vrot.slane %v348, 1
      %v383 = vrot.slane %v350, 2
      %v384 = vor.u32 %v382, %v383
      %v385 = vrot.slane %v359, 1
      %v386 = vrot.slane %v355, 2
      %v387 = vor.u32 %v385, %v386
      %v388 = vsel %vm381, %v384, %v387
      %v389 = vshrl.u32 %v345, 16
      %v391 = vrot.slane %v389, 1
      %v392 = vrot.slane %v363, 2
      %v393 = vor.u32 %v391, %v392
      %v394 = vsel %vm381, %v387, %v393
      %395 = vrot.lane.b32.xlu0 %v388, 48
      %v396 = vpop.permute.xlu0 %395
      %397 = vrot.lane.b32.xlu0 %v394, 48
      %v398 = vpop.permute.xlu0 %397
      %vm399 = vcmask 130048
      %v401 = vsel %vm399, %v341, %v368
      %v403 = vsel %vm399, %v342, %v370
      %vm404 = vcmask 261120
      %v406 = vsel %vm404, %v401, %v378
      %v408 = vsel %vm404, %v403, %v380
      %vm409 = vcmask 392192
      %v411 = vsel %vm409, %v406, %v396
      %v413 = vsel %vm409, %v408, %v398
      %v414 = vld [vmem:[%s1] sm:$0xf]
      %v415 = vld [vmem:[%s1 + $0x4] sm:$0xf]
      %v416 = vld [vmem:[%s1 + $0x8] sm:$0xf]
      %v417 = vld [vmem:[%s1 + $0xc] sm:$0xf]
      %v418 = vld [vmem:[%s1 + $0x10] sm:$0xf]
      %v419 = vld [vmem:[%s1 + $0x14] sm:$0xf]
      %v420 = vld [vmem:[%s1 + $0x18] sm:$0xf]
      %v421 = vld [vmem:[%s1 + $0x1c] sm:$0xf]
      %v422 = vld [vmem:[%s2] sm:$0x1]
      %v424 = vperm.slane %v422, 0
      %v434 = vunpack.c.l.b16 %v414
      %v435 = vunpack.c.l.b16 %v415
      %v436 = vunpack.c.l.b16 %v416
      %v437 = vunpack.c.l.b16 %v417
      %v438 = vunpack.c.l.b16 %v418
      %v439 = vunpack.c.l.b16 %v419
      %v440 = vunpack.c.l.b16 %v420
      %v441 = vunpack.c.l.b16 %v421
      %v442 = vpack.c.b16 %v435, %v434
      %v443 = vpack.c.b16 %v437, %v436
      %v444 = vpack.c.b16 %v439, %v438
      %v445 = vpack.c.b16 %v441, %v440
      %vm450 = vcmask 523264
      %v451 = vsel %vm450, %v411, 0
      %v453 = vsel %vm450, %v413, 0
      %455 = vmatpush.bf16.msra.mxu0 0
      %456 = vmatpush.bf16.msra.mxu0 0
      %457 = vmatpush.bf16.msra.mxu0 0
      %458 = vmatpush.bf16.msra.mxu0 0
      %459 = vmatpush.bf16.msra.mxu0 %v445
      %460 = vmatpush.bf16.msra.mxu0 %v444
      %461 = vmatpush.bf16.msra.mxu0 %v443
      %462 = vmatpush.bf16.msra.mxu0 %v442
      %463 = vmatmul.bf16.gmra.mxu0 %v451
      %v464 = vpop.f32.mrf.mxu0
      %v465 = vadd.f32 %v424, %v464
      %v466 = vpop.f32.mrf.mxu0
      %v467 = vadd.f32 %v424, %v466
      %468 = vmatmul.bf16.gmra.mxu0 %v453
      %v469 = vpop.f32.mrf.mxu0
      %v470 = vadd.f32 %v424, %v469
      %v471 = vpop.f32.mrf.mxu0
      %v472 = vadd.f32 %v424, %v471
      %473 = vdwg.mxu0
      %vm474 = vcmp.gt.f32.partialorder %v465, 0.0
      %vm475 = vcmp.gt.f32.partialorder %v467, 0.0
      %vm476 = vcmp.gt.f32.partialorder %v470, 0.0
      %vm477 = vcmp.gt.f32.partialorder %v472, 0.0
      %v478 = vmin.f32 %v465, 0.0
      %v479 = vmin.f32 %v467, 0.0
      %v480 = vmin.f32 %v470, 0.0
      %v481 = vmin.f32 %v472, 0.0
      %v482 = vmul.f32 %v478, 1.442695
      %v483 = vpow.pop %v482
      %v484 = vmul.f32 %v479, 1.442695
      %v485 = vpow.pop %v484
      %v486 = vmul.f32 %v480, 1.442695
      %v487 = vpow.pop %v486
      %v488 = vmul.f32 %v481, 1.442695
      %v489 = vpow.pop %v488
      %v490 = vsub.f32 %v483, 1.0
      %v491 = vsub.f32 %v485, 1.0
      %v492 = vsub.f32 %v487, 1.0
      %v493 = vsub.f32 %v489, 1.0
      %v494 = vsel %vm474, %v465, %v490
      %v495 = vsel %vm475, %v467, %v491
      %v496 = vsel %vm476, %v470, %v492
      %v497 = vsel %vm477, %v472, %v493
      %v498 = vpack.c.bf16 %v494, %v494
      %v499 = vpack.c.bf16 %v495, %v495
      %v500 = vpack.c.bf16 %v496, %v496
      %v501 = vpack.c.bf16 %v497, %v497
      %502 = vst.msk [vmem:[#allocation2 + $0x10] sm:$0xf] %vm280, %v498
      %503 = vst.msk [vmem:[#allocation2 + $0x14] sm:$0xf] %vm280, %v499
      %504 = vst.msk [vmem:[#allocation2 + $0x18] sm:$0xf] %vm280, %v500
      %505 = vst.msk [vmem:[#allocation2 + $0x1c] sm:$0xf] %vm280, %v501
      %v506 = vld [vmem:[#allocation2 + $0xc] sm:$0xf]
      %v507 = vld [vmem:[#allocation2 + $0x10] sm:$0xf]
      %v508 = vld [vmem:[#allocation2 + $0x14] sm:$0xf]
      %v509 = vld [vmem:[#allocation2 + $0x18] sm:$0xf]
      %v510 = vld [vmem:[#allocation2 + $0x1c] sm:$0xf]
      %v511 = vld [vmem:[#allocation2 + $0x20] sm:$0xf]
      %v517 = vunpack.c.l.b16 %v506
      %v518 = vunpack.c.l.b16 %v507
      %v519 = vunpack.c.l.b16 %v508
      %v520 = vunpack.c.l.b16 %v509
      %v521 = vunpack.c.l.b16 %v510
      %v522 = vpack.c.b16 %v518, %v517
      %v523 = vpack.c.b16 %v520, %v519
      %v524 = vpack.c.b16 %v521, %v521
      %v526 = vshrl.u32 %v522, 16
      %v528 = vshll.u32 %v522, 16
      %v530 = vrot.slane %v528, 1
      %v531 = vor.u32 %v526, %v530
      %v533 = vshll.u32 %v523, 16
      %v535 = vrot.slane %v533, 1
      %v536 = vsel %vm346, %v531, %v535
      %v537 = vshrl.u32 %v523, 16
      %v539 = vor.u32 %v537, %v535
      %v541 = vshll.u32 %v524, 16
      %v543 = vrot.slane %v541, 1
      %v544 = vsel %vm346, %v539, %v543
      %v545 = vshrl.u32 %v524, 16
      %v547 = vor.u32 %v545, %v543
      %548 = vrot.lane.b32.xlu0 %v536, 16
      %v549 = vpop.permute.xlu0 %548
      %550 = vrot.lane.b32.xlu0 %v544, 16
      %v551 = vpop.permute.xlu0 %550
      %552 = vrot.lane.b32.xlu0 %v547, 16
      %v553 = vpop.permute.xlu0 %552
      %v554 = vrot.slane %v522, 1
      %v555 = vrot.slane %v523, 1
      %v556 = vsel %vm371, %v554, %v555
      %v557 = vrot.slane %v524, 1
      %v558 = vsel %vm371, %v555, %v557
      %559 = vrot.lane.b32.xlu0 %v556, 32
      %v560 = vpop.permute.xlu0 %559
      %561 = vrot.lane.b32.xlu0 %v558, 32
      %v562 = vpop.permute.xlu0 %561
      %563 = vrot.lane.b32.xlu0 %v557, 32
      %v564 = vpop.permute.xlu0 %563
      %v565 = vpack.c.b16 %v519, %v518
      %v566 = vpack.c.b16 %v521, %v520
      %vm567 = vsmask.f32 2304
      %v569 = vshrl.u32 %v565, 16
      %v571 = vrot.slane %v569, 5
      %v572 = vshll.u32 %v565, 16
      %v574 = vrot.slane %v572, 6
      %v575 = vor.u32 %v571, %v574
      %v577 = vshrl.u32 %v566, 16
      %v579 = vrot.slane %v577, 5
      %v580 = vshll.u32 %v566, 16
      %v582 = vrot.slane %v580, 6
      %v583 = vor.u32 %v579, %v582
      %v584 = vsel %vm567, %v575, %v583
      %585 = vrot.lane.b32.xlu0 %v575, 48
      %v586 = vpop.permute.xlu0 %585
      %587 = vrot.lane.b32.xlu0 %v584, 48
      %v588 = vpop.permute.xlu0 %587
      %589 = vrot.lane.b32.xlu0 %v583, 48
      %v590 = vpop.permute.xlu0 %589
      %v592 = vunpack.c.l.b16 %v511
      %v593 = vpack.c.b16 %v592, %v592
      %vm594 = vcmask 1041408
      %v595 = vrot.slane %v565, 6
      %v596 = vrot.slane %v566, 6
      %v597 = vsel %vm594, %v595, %v596
      %v598 = vrot.slane %v593, 6
      %v599 = vsel %vm594, %v596, %v598
      %600 = vrot.lane.b32.xlu0 %v595, 64
      %v601 = vpop.permute.xlu0 %600
      %602 = vrot.lane.b32.xlu0 %v597, 64
      %v603 = vpop.permute.xlu0 %602
      %604 = vrot.lane.b32.xlu0 %v599, 64
      %v605 = vpop.permute.xlu0 %604
      %vm606 = vsmask.f32 1280
      %v607 = vrot.slane %v569, 6
      %v608 = vrot.slane %v572, 7
      %v609 = vor.u32 %v607, %v608
      %v610 = vrot.slane %v577, 6
      %v611 = vrot.slane %v580, 7
      %v612 = vor.u32 %v610, %v611
      %v613 = vsel %vm606, %v609, %v612
      %v615 = vshrl.u32 %v593, 16
      %v617 = vrot.slane %v615, 6
      %v618 = vshll.u32 %v593, 16
      %v620 = vrot.slane %v618, 7
      %v621 = vor.u32 %v617, %v620
      %v622 = vsel %vm606, %v612, %v621
      %623 = vrot.lane.b32.xlu0 %v609, 80
      %v624 = vpop.permute.xlu0 %623
      %625 = vrot.lane.b32.xlu0 %v613, 80
      %v626 = vpop.permute.xlu0 %625
      %627 = vrot.lane.b32.xlu0 %v622, 80
      %v628 = vpop.permute.xlu0 %627
      %vm629 = vcmask 1040384
      %v630 = vrot.slane %v565, 7
      %v631 = vrot.slane %v566, 7
      %v632 = vsel %vm629, %v630, %v631
      %v633 = vrot.slane %v593, 7
      %v634 = vsel %vm629, %v631, %v633
      %635 = vrot.lane.b32.xlu0 %v630, 96
      %v636 = vpop.permute.xlu0 %635
      %637 = vrot.lane.b32.xlu0 %v632, 96
      %v638 = vpop.permute.xlu0 %637
      %639 = vrot.lane.b32.xlu0 %v634, 96
      %v640 = vpop.permute.xlu0 %639
      %v642 = vsel %vm399, %v522, %v549
      %v644 = vsel %vm399, %v523, %v551
      %v646 = vsel %vm399, %v524, %v553
      %v648 = vsel %vm404, %v642, %v560
      %v650 = vsel %vm404, %v644, %v562
      %v652 = vsel %vm404, %v646, %v564
      %v654 = vsel %vm409, %v648, %v586
      %v656 = vsel %vm409, %v650, %v588
      %v658 = vsel %vm409, %v652, %v590
      %v660 = vsel %vm450, %v654, %v601
      %v662 = vsel %vm450, %v656, %v603
      %v664 = vsel %vm450, %v658, %v605
      %vm665 = vcmask 654336
      %v667 = vsel %vm665, %v660, %v624
      %v669 = vsel %vm665, %v662, %v626
      %v671 = vsel %vm665, %v664, %v628
      %vm672 = vcmask 785408
      %v674 = vsel %vm672, %v667, %v636
      %v676 = vsel %vm672, %v669, %v638
      %v678 = vsel %vm672, %v671, %v640
      %v679 = vld [vmem:[%s3] sm:$0xf]
      %v680 = vld [vmem:[%s3 + $0x4] sm:$0xf]
      %v681 = vld [vmem:[%s3 + $0x8] sm:$0xf]
      %v682 = vld [vmem:[%s3 + $0xc] sm:$0xf]
      %v683 = vld [vmem:[%s3 + $0x10] sm:$0xf]
      %v684 = vld [vmem:[%s3 + $0x14] sm:$0xf]
      %v685 = vld [vmem:[%s3 + $0x18] sm:$0xf]
      %v686 = vld [vmem:[%s3 + $0x1c] sm:$0xf]
      %v687 = vld [vmem:[%s3 + $0x20] sm:$0xf]
      %v688 = vld [vmem:[%s3 + $0x24] sm:$0xf]
      %v689 = vld [vmem:[%s3 + $0x28] sm:$0xf]
      %v690 = vld [vmem:[%s3 + $0x2c] sm:$0xf]
      %v691 = vld [vmem:[%s3 + $0x30] sm:$0xf]
      %v692 = vld [vmem:[%s3 + $0x34] sm:$0xf]
      %v693 = vld [vmem:[%s4] sm:$0x1]
      %v695 = vperm.slane %v693, 0
      %vm697 = vsmask.f32 5376
      %v698 = vshrl.u32 %v674, 16
      %v700 = vrot.slane %v698, 2
      %v701 = vshll.u32 %v674, 16
      %v703 = vrot.slane %v701, 3
      %v704 = vor.u32 %v700, %v703
      %v705 = vshrl.u32 %v676, 16
      %v707 = vrot.slane %v705, 2
      %v708 = vshll.u32 %v676, 16
      %v710 = vrot.slane %v708, 3
      %v711 = vor.u32 %v707, %v710
      %v712 = vsel %vm697, %v704, %v711
      %v713 = vshrl.u32 %v678, 16
      %v715 = vrot.slane %v713, 2
      %v716 = vshll.u32 %v678, 16
      %v718 = vrot.slane %v716, 3
      %v719 = vor.u32 %v715, %v718
      %v720 = vsel %vm697, %v711, %v719
      %v735 = vunpack.c.l.b16 %v679
      %v736 = vunpack.c.l.b16 %v680
      %v737 = vunpack.c.l.b16 %v681
      %v738 = vunpack.c.l.b16 %v682
      %v739 = vunpack.c.l.b16 %v683
      %v740 = vunpack.c.l.b16 %v684
      %v741 = vunpack.c.l.b16 %v685
      %v742 = vunpack.c.l.b16 %v686
      %v743 = vunpack.c.l.b16 %v687
      %v744 = vunpack.c.l.b16 %v688
      %v745 = vunpack.c.l.b16 %v689
      %v746 = vunpack.c.l.b16 %v690
      %v747 = vunpack.c.l.b16 %v691
      %v748 = vunpack.c.l.b16 %v692
      %v749 = vpack.c.b16 %v736, %v735
      %v750 = vpack.c.b16 %v738, %v737
      %v751 = vpack.c.b16 %v740, %v739
      %v752 = vpack.c.b16 %v742, %v741
      %v753 = vpack.c.b16 %v744, %v743
      %v754 = vpack.c.b16 %v746, %v745
      %v755 = vpack.c.b16 %v748, %v747
      %vm763 = vcmask 916480
      %v765 = vsel %vm763, %v712, 0
      %v768 = vsel %vm763, %v720, 0
      %770 = vmatpush.bf16.msra.mxu0 0
      %771 = vmatpush.bf16.msra.mxu0 %v755
      %772 = vmatpush.bf16.msra.mxu0 %v754
      %773 = vmatpush.bf16.msra.mxu0 %v753
      %774 = vmatpush.bf16.msra.mxu0 %v752
      %775 = vmatpush.bf16.msra.mxu0 %v751
      %776 = vmatpush.bf16.msra.mxu0 %v750
      %777 = vmatpush.bf16.msra.mxu0 %v749
      %778 = vmatmul.bf16.gmra.mxu0 %v765
      %v779 = vpop.f32.mrf.mxu0
      %v780 = vadd.f32 %v695, %v779
      %v781 = vpop.f32.mrf.mxu0
      %v782 = vadd.f32 %v695, %v781
      %783 = vmatmul.bf16.gmra.mxu0 %v768
      %v784 = vpop.f32.mrf.mxu0
      %v785 = vadd.f32 %v695, %v784
      %v786 = vpop.f32.mrf.mxu0
      %v787 = vadd.f32 %v695, %v786
      %788 = vdwg.mxu0
      %vm789 = vcmp.gt.f32.partialorder %v780, 0.0
      %vm790 = vcmp.gt.f32.partialorder %v782, 0.0
      %vm791 = vcmp.gt.f32.partialorder %v785, 0.0
      %vm792 = vcmp.gt.f32.partialorder %v787, 0.0
      %v793 = vmin.f32 %v780, 0.0
      %v794 = vmin.f32 %v782, 0.0
      %v795 = vmin.f32 %v785, 0.0
      %v796 = vmin.f32 %v787, 0.0
      %v797 = vmul.f32 %v793, 1.442695
      %v798 = vpow.pop %v797
      %v799 = vmul.f32 %v794, 1.442695
      %v800 = vpow.pop %v799
      %v801 = vmul.f32 %v795, 1.442695
      %v802 = vpow.pop %v801
      %v803 = vmul.f32 %v796, 1.442695
      %v804 = vpow.pop %v803
      %v805 = vsub.f32 %v798, 1.0
      %v806 = vsub.f32 %v800, 1.0
      %v807 = vsub.f32 %v802, 1.0
      %v808 = vsub.f32 %v804, 1.0
      %v809 = vsel %vm789, %v780, %v805
      %v810 = vsel %vm790, %v782, %v806
      %v811 = vsel %vm791, %v785, %v807
      %v812 = vsel %vm792, %v787, %v808
      %v813 = vpack.c.bf16 %v810, %v809
      %v814 = vpack.c.bf16 %v812, %v811
      %v815 = vld [vmem:[%s5] sm:$0xf]
      %v816 = vld [vmem:[%s5 + $0x4] sm:$0xf]
      %v817 = vld [vmem:[%s6] sm:$0x1]
      %v819 = vperm.slane %v817, 0
      %v823 = vunpack.c.l.b16 %v815
      %v824 = vunpack.c.l.b16 %v816
      %v825 = vpack.c.b16 %v824, %v823
      %v828 = vsel %vm399, %v813, 0
      %v831 = vsel %vm399, %v814, 0
      %833 = vmatpush.bf16.msra.mxu0 0
      %834 = vmatpush.bf16.msra.mxu0 0
      %835 = vmatpush.bf16.msra.mxu0 0
      %836 = vmatpush.bf16.msra.mxu0 0
      %837 = vmatpush.bf16.msra.mxu0 0
      %838 = vmatpush.bf16.msra.mxu0 0
      %839 = vmatpush.bf16.msra.mxu0 0
      %840 = vmatpush.bf16.msra.mxu0 %v825
      %841 = vmatmul.bf16.gmra.mxu0 %v828
      %v842 = vpop.f32.mrf.mxu0
      %v843 = vadd.f32 %v819, %v842
      %v844 = vpop.f32.mrf.mxu0
      %v845 = vadd.f32 %v819, %v844
      %846 = vmatmul.bf16.gmra.mxu0 %v831
      %v847 = vpop.f32.mrf.mxu0
      %v848 = vadd.f32 %v819, %v847
      %v849 = vpop.f32.mrf.mxu0
      %v850 = vadd.f32 %v819, %v849
      %851 = vdwg.mxu0
      %v852 = vadd.f32 %v843, %v465
      %v853 = vadd.f32 %v845, %v467
      %v854 = vadd.f32 %v848, %v470
      %v855 = vadd.f32 %v850, %v472
      %vm856 = vcmp.gt.f32.partialorder %v852, 0.0
      %vm857 = vcmp.gt.f32.partialorder %v853, 0.0
      %vm858 = vcmp.gt.f32.partialorder %v854, 0.0
      %vm859 = vcmp.gt.f32.partialorder %v855, 0.0
      %v860 = vmin.f32 %v852, 0.0
      %v861 = vmin.f32 %v853, 0.0
      %v862 = vmin.f32 %v854, 0.0
      %v863 = vmin.f32 %v855, 0.0
      %v864 = vmul.f32 %v860, 1.442695
      %v865 = vpow.pop %v864
      %v866 = vmul.f32 %v861, 1.442695
      %v867 = vpow.pop %v866
      %v868 = vmul.f32 %v862, 1.442695
      %v869 = vpow.pop %v868
      %v870 = vmul.f32 %v863, 1.442695
      %v871 = vpow.pop %v870
      %v872 = vsub.f32 %v865, 1.0
      %v873 = vsub.f32 %v867, 1.0
      %v874 = vsub.f32 %v869, 1.0
      %v875 = vsub.f32 %v871, 1.0
      %v876 = vsel %vm856, %v852, %v872
      %v877 = vsel %vm857, %v853, %v873
      %v878 = vsel %vm858, %v854, %v874
      %v879 = vsel %vm859, %v855, %v875
      %v880 = vpack.c.bf16 %v876, %v876
      %v881 = vpack.c.bf16 %v877, %v877
      %v882 = vpack.c.bf16 %v878, %v878
      %v883 = vpack.c.bf16 %v879, %v879
      %884 = vst.msk [vmem:[#allocation2 + $0x10] sm:$0xf] %vm280, %v880
      %885 = vst.msk [vmem:[#allocation2 + $0x14] sm:$0xf] %vm280, %v881
      %886 = vst.msk [vmem:[#allocation2 + $0x18] sm:$0xf] %vm280, %v882
      %887 = vst.msk [vmem:[#allocation2 + $0x1c] sm:$0xf] %vm280, %v883
      %v888 = vld [vmem:[#allocation2 + $0x8] sm:$0xf]
      %v889 = vld [vmem:[#allocation2 + $0xc] sm:$0xf]
      %v890 = vld [vmem:[#allocation2 + $0x10] sm:$0xf]
      %v891 = vld [vmem:[#allocation2 + $0x14] sm:$0xf]
      %v892 = vld [vmem:[#allocation2 + $0x18] sm:$0xf]
      %v893 = vld [vmem:[#allocation2 + $0x1c] sm:$0xf]
      %v894 = vld [vmem:[#allocation2 + $0x20] sm:$0xf]
      %v895 = vld [vmem:[#allocation2 + $0x24] sm:$0xf]
      %v901 = vunpack.c.l.b16 %v888
      %v902 = vunpack.c.l.b16 %v889
      %v903 = vunpack.c.l.b16 %v890
      %v904 = vunpack.c.l.b16 %v891
      %v905 = vunpack.c.l.b16 %v892
      %v906 = vpack.c.b16 %v902, %v901
      %v907 = vpack.c.b16 %v904, %v903
      %v908 = vpack.c.b16 %v905, %v905
      %v910 = vunpack.c.l.b16 %v893
      %v911 = vpack.c.b16 %v903, %v902
      %v912 = vpack.c.b16 %v905, %v904
      %v913 = vpack.c.b16 %v910, %v910
      %v915 = vshrl.u32 %v911, 16
      %v917 = vrot.slane %v915, 5
      %v918 = vshll.u32 %v911, 16
      %v920 = vrot.slane %v918, 6
      %v921 = vor.u32 %v917, %v920
      %v923 = vshrl.u32 %v912, 16
      %v925 = vrot.slane %v923, 5
      %v926 = vshll.u32 %v912, 16
      %v928 = vrot.slane %v926, 6
      %v929 = vor.u32 %v925, %v928
      %v930 = vsel %vm567, %v921, %v929
      %v932 = vshrl.u32 %v913, 16
      %v934 = vrot.slane %v932, 5
      %v935 = vshll.u32 %v913, 16
      %v937 = vrot.slane %v935, 6
      %v938 = vor.u32 %v934, %v937
      %v939 = vsel %vm567, %v929, %v938
      %940 = vrot.lane.b32.xlu0 %v921, 16
      %v941 = vpop.permute.xlu0 %940
      %942 = vrot.lane.b32.xlu0 %v930, 16
      %v943 = vpop.permute.xlu0 %942
      %944 = vrot.lane.b32.xlu0 %v939, 16
      %v945 = vpop.permute.xlu0 %944
      %v946 = vrot.slane %v911, 7
      %v947 = vrot.slane %v912, 7
      %v948 = vsel %vm629, %v946, %v947
      %v949 = vrot.slane %v913, 7
      %v950 = vsel %vm629, %v947, %v949
      %951 = vrot.lane.b32.xlu0 %v946, 32
      %v952 = vpop.permute.xlu0 %951
      %953 = vrot.lane.b32.xlu0 %v948, 32
      %v954 = vpop.permute.xlu0 %953
      %955 = vrot.lane.b32.xlu0 %v950, 32
      %v956 = vpop.permute.xlu0 %955
      %v957 = vpack.c.b16 %v910, %v905
      %vm958 = vsmask.f32 3328
      %v960 = vshrl.u32 %v907, 16
      %v962 = vrot.slane %v960, 4
      %v963 = vshll.u32 %v907, 16
      %v965 = vrot.slane %v963, 5
      %v966 = vor.u32 %v962, %v965
      %v968 = vshrl.u32 %v957, 16
      %v970 = vrot.slane %v968, 4
      %v971 = vshll.u32 %v957, 16
      %v973 = vrot.slane %v971, 5
      %v974 = vor.u32 %v970, %v973
      %v975 = vsel %vm958, %v966, %v974
      %976 = vrot.lane.b32.xlu0 %v966, 48
      %v977 = vpop.permute.xlu0 %976
      %978 = vrot.lane.b32.xlu0 %v975, 48
      %v979 = vpop.permute.xlu0 %978
      %980 = vrot.lane.b32.xlu0 %v974, 48
      %v981 = vpop.permute.xlu0 %980
      %v983 = vunpack.c.l.b16 %v894
      %v984 = vpack.c.b16 %v983, %v983
      %v985 = vrot.slane %v907, 6
      %v986 = vrot.slane %v957, 6
      %v987 = vsel %vm594, %v985, %v986
      %v988 = vrot.slane %v984, 6
      %v989 = vsel %vm594, %v986, %v988
      %990 = vrot.lane.b32.xlu0 %v985, 64
      %v991 = vpop.permute.xlu0 %990
      %992 = vrot.lane.b32.xlu0 %v987, 64
      %v993 = vpop.permute.xlu0 %992
      %994 = vrot.lane.b32.xlu0 %v989, 64
      %v995 = vpop.permute.xlu0 %994
      %vm996 = vsmask.f32 256
      %v997 = vrot.slane %v960, 7
      %v998 = vor.u32 %v997, %v963
      %v999 = vrot.slane %v968, 7
      %v1000 = vor.u32 %v999, %v971
      %v1001 = vsel %vm996, %v997, %v1000
      %v1003 = vshrl.u32 %v984, 16
      %v1005 = vrot.slane %v1003, 7
      %v1006 = vshll.u32 %v984, 16
      %v1008 = vor.u32 %v1005, %v1006
      %v1009 = vsel %vm996, %v999, %v1008
      %1010 = vrot.lane.b32.xlu0 %v998, 80
      %v1011 = vpop.permute.xlu0 %1010
      %1012 = vrot.lane.b32.xlu0 %v1001, 80
      %v1013 = vpop.permute.xlu0 %1012
      %1014 = vrot.lane.b32.xlu0 %v1009, 80
      %v1015 = vpop.permute.xlu0 %1014
      %v1017 = vunpack.c.l.b16 %v895
      %v1018 = vpack.c.b16 %v983, %v910
      %v1019 = vpack.c.b16 %v1017, %v1017
      %vm1020 = vcmask 1042432
      %v1021 = vrot.slane %v912, 5
      %v1022 = vrot.slane %v1018, 5
      %v1023 = vsel %vm1020, %v1021, %v1022
      %v1024 = vrot.slane %v1019, 5
      %v1025 = vsel %vm1020, %v1022, %v1024
      %1026 = vrot.lane.b32.xlu0 %v1021, 96
      %v1027 = vpop.permute.xlu0 %1026
      %1028 = vrot.lane.b32.xlu0 %v1023, 96
      %v1029 = vpop.permute.xlu0 %1028
      %1030 = vrot.lane.b32.xlu0 %v1025, 96
      %v1031 = vpop.permute.xlu0 %1030
      %v1034 = vsel %vm399, %v906, %v941
      %v1036 = vsel %vm399, %v907, %v943
      %v1039 = vsel %vm399, %v908, %v945
      %v1041 = vsel %vm404, %v1034, %v952
      %v1043 = vsel %vm404, %v1036, %v954
      %v1045 = vsel %vm404, %v1039, %v956
      %v1047 = vsel %vm409, %v1041, %v977
      %v1049 = vsel %vm409, %v1043, %v979
      %v1051 = vsel %vm409, %v1045, %v981
      %v1053 = vsel %vm450, %v1047, %v991
      %v1055 = vsel %vm450, %v1049, %v993
      %v1057 = vsel %vm450, %v1051, %v995
      %v1059 = vsel %vm665, %v1053, %v1011
      %v1061 = vsel %vm665, %v1055, %v1013
      %v1063 = vsel %vm665, %v1057, %v1015
      %v1065 = vsel %vm672, %v1059, %v1027
      %v1067 = vsel %vm672, %v1061, %v1029
      %v1069 = vsel %vm672, %v1063, %v1031
      %s1070 = scalar_lea.vmem %s3, 56
      %v1071 = vld [vmem:[%s1070] sm:$0xf]
      %v1072 = vld [vmem:[%s1070 + $0x4] sm:$0xf]
      %v1073 = vld [vmem:[%s1070 + $0x8] sm:$0xf]
      %v1074 = vld [vmem:[%s1070 + $0xc] sm:$0xf]
      %v1075 = vld [vmem:[%s1070 + $0x10] sm:$0xf]
      %v1076 = vld [vmem:[%s1070 + $0x14] sm:$0xf]
      %v1077 = vld [vmem:[%s1070 + $0x18] sm:$0xf]
      %v1078 = vld [vmem:[%s1070 + $0x1c] sm:$0xf]
      %v1079 = vld [vmem:[%s1070 + $0x20] sm:$0xf]
      %v1080 = vld [vmem:[%s1070 + $0x24] sm:$0xf]
      %v1081 = vld [vmem:[%s1070 + $0x28] sm:$0xf]
      %v1082 = vld [vmem:[%s1070 + $0x2c] sm:$0xf]
      %v1083 = vld [vmem:[%s1070 + $0x30] sm:$0xf]
      %v1084 = vld [vmem:[%s1070 + $0x34] sm:$0xf]
      %s1085 = scalar_lea.vmem %s4, 1
      %v1086 = vld [vmem:[%s1085] sm:$0x1]
      %v1088 = vperm.slane %v1086, 0
      %vm1090 = vsmask.f32 4352
      %v1091 = vshrl.u32 %v1065, 16
      %v1093 = vrot.slane %v1091, 3
      %v1094 = vshll.u32 %v1065, 16
      %v1096 = vrot.slane %v1094, 4
      %v1097 = vor.u32 %v1093, %v1096
      %v1098 = vshrl.u32 %v1067, 16
      %v1100 = vrot.slane %v1098, 3
      %v1101 = vshll.u32 %v1067, 16
      %v1103 = vrot.slane %v1101, 4
      %v1104 = vor.u32 %v1100, %v1103
      %v1105 = vsel %vm1090, %v1097, %v1104
      %v1106 = vshrl.u32 %v1069, 16
      %v1108 = vrot.slane %v1106, 3
      %v1109 = vshll.u32 %v1069, 16
      %v1111 = vrot.slane %v1109, 4
      %v1112 = vor.u32 %v1108, %v1111
      %v1113 = vsel %vm1090, %v1104, %v1112
      %v1128 = vunpack.c.l.b16 %v1071
      %v1129 = vunpack.c.l.b16 %v1072
      %v1130 = vunpack.c.l.b16 %v1073
      %v1131 = vunpack.c.l.b16 %v1074
      %v1132 = vunpack.c.l.b16 %v1075
      %v1133 = vunpack.c.l.b16 %v1076
      %v1134 = vunpack.c.l.b16 %v1077
      %v1135 = vunpack.c.l.b16 %v1078
      %v1136 = vunpack.c.l.b16 %v1079
      %v1137 = vunpack.c.l.b16 %v1080
      %v1138 = vunpack.c.l.b16 %v1081
      %v1139 = vunpack.c.l.b16 %v1082
      %v1140 = vunpack.c.l.b16 %v1083
      %v1141 = vunpack.c.l.b16 %v1084
      %v1142 = vpack.c.b16 %v1129, %v1128
      %v1143 = vpack.c.b16 %v1131, %v1130
      %v1144 = vpack.c.b16 %v1133, %v1132
      %v1145 = vpack.c.b16 %v1135, %v1134
      %v1146 = vpack.c.b16 %v1137, %v1136
      %v1147 = vpack.c.b16 %v1139, %v1138
      %v1148 = vpack.c.b16 %v1141, %v1140
      %v1157 = vsel %vm763, %v1105, 0
      %v1160 = vsel %vm763, %v1113, 0
      %1162 = vmatpush.bf16.msra.mxu0 0
      %1163 = vmatpush.bf16.msra.mxu0 %v1148
      %1164 = vmatpush.bf16.msra.mxu0 %v1147
      %1165 = vmatpush.bf16.msra.mxu0 %v1146
      %1166 = vmatpush.bf16.msra.mxu0 %v1145
      %1167 = vmatpush.bf16.msra.mxu0 %v1144
      %1168 = vmatpush.bf16.msra.mxu0 %v1143
      %1169 = vmatpush.bf16.msra.mxu0 %v1142
      %1170 = vmatmul.bf16.gmra.mxu0 %v1157
      %v1171 = vpop.f32.mrf.mxu0
      %v1172 = vadd.f32 %v1088, %v1171
      %v1173 = vpop.f32.mrf.mxu0
      %v1174 = vadd.f32 %v1088, %v1173
      %1175 = vmatmul.bf16.gmra.mxu0 %v1160
      %v1176 = vpop.f32.mrf.mxu0
      %v1177 = vadd.f32 %v1088, %v1176
      %v1178 = vpop.f32.mrf.mxu0
      %v1179 = vadd.f32 %v1088, %v1178
      %1180 = vdwg.mxu0
      %vm1181 = vcmp.gt.f32.partialorder %v1172, 0.0
      %vm1182 = vcmp.gt.f32.partialorder %v1174, 0.0
      %vm1183 = vcmp.gt.f32.partialorder %v1177, 0.0
      %vm1184 = vcmp.gt.f32.partialorder %v1179, 0.0
      %v1185 = vmin.f32 %v1172, 0.0
      %v1186 = vmin.f32 %v1174, 0.0
      %v1187 = vmin.f32 %v1177, 0.0
      %v1188 = vmin.f32 %v1179, 0.0
      %v1189 = vmul.f32 %v1185, 1.442695
      %v1190 = vpow.pop %v1189
      %v1191 = vmul.f32 %v1186, 1.442695
      %v1192 = vpow.pop %v1191
      %v1193 = vmul.f32 %v1187, 1.442695
      %v1194 = vpow.pop %v1193
      %v1195 = vmul.f32 %v1188, 1.442695
      %v1196 = vpow.pop %v1195
      %v1197 = vsub.f32 %v1190, 1.0
      %v1198 = vsub.f32 %v1192, 1.0
      %v1199 = vsub.f32 %v1194, 1.0
      %v1200 = vsub.f32 %v1196, 1.0
      %v1201 = vsel %vm1181, %v1172, %v1197
      %v1202 = vsel %vm1182, %v1174, %v1198
      %v1203 = vsel %vm1183, %v1177, %v1199
      %v1204 = vsel %vm1184, %v1179, %v1200
      %v1205 = vpack.c.bf16 %v1202, %v1201
      %v1206 = vpack.c.bf16 %v1204, %v1203
      %s1207 = scalar_lea.vmem %s5, 8
      %v1208 = vld [vmem:[%s1207] sm:$0xf]
      %v1209 = vld [vmem:[%s1207 + $0x4] sm:$0xf]
      %s1210 = scalar_lea.vmem %s6, 1
      %v1211 = vld [vmem:[%s1210] sm:$0x1]
      %v1213 = vperm.slane %v1211, 0
      %v1217 = vunpack.c.l.b16 %v1208
      %v1218 = vunpack.c.l.b16 %v1209
      %v1219 = vpack.c.b16 %v1218, %v1217
      %v1222 = vsel %vm399, %v1205, 0
      %v1225 = vsel %vm399, %v1206, 0
      %1227 = vmatpush.bf16.msra.mxu0 0
      %1228 = vmatpush.bf16.msra.mxu0 0
      %1229 = vmatpush.bf16.msra.mxu0 0
      %1230 = vmatpush.bf16.msra.mxu0 0
      %1231 = vmatpush.bf16.msra.mxu0 0
      %1232 = vmatpush.bf16.msra.mxu0 0
      %1233 = vmatpush.bf16.msra.mxu0 0
      %1234 = vmatpush.bf16.msra.mxu0 %v1219
      %1235 = vmatmul.bf16.gmra.mxu0 %v1222
      %v1236 = vpop.f32.mrf.mxu0
      %v1237 = vadd.f32 %v1213, %v1236
      %v1238 = vpop.f32.mrf.mxu0
      %v1239 = vadd.f32 %v1213, %v1238
      %1240 = vmatmul.bf16.gmra.mxu0 %v1225
      %v1241 = vpop.f32.mrf.mxu0
      %v1242 = vadd.f32 %v1213, %v1241
      %v1243 = vpop.f32.mrf.mxu0
      %v1244 = vadd.f32 %v1213, %v1243
      %1245 = vdwg.mxu0
      %v1246 = vadd.f32 %v1237, %v852
      %v1247 = vadd.f32 %v1239, %v853
      %v1248 = vadd.f32 %v1242, %v854
      %v1249 = vadd.f32 %v1244, %v855
      %vm1250 = vcmp.gt.f32.partialorder %v1246, 0.0
      %vm1251 = vcmp.gt.f32.partialorder %v1247, 0.0
      %vm1252 = vcmp.gt.f32.partialorder %v1248, 0.0
      %vm1253 = vcmp.gt.f32.partialorder %v1249, 0.0
      %v1254 = vmin.f32 %v1246, 0.0
      %v1255 = vmin.f32 %v1247, 0.0
      %v1256 = vmin.f32 %v1248, 0.0
      %v1257 = vmin.f32 %v1249, 0.0
      %v1258 = vmul.f32 %v1254, 1.442695
      %v1259 = vpow.pop %v1258
      %v1260 = vmul.f32 %v1255, 1.442695
      %v1261 = vpow.pop %v1260
      %v1262 = vmul.f32 %v1256, 1.442695
      %v1263 = vpow.pop %v1262
      %v1264 = vmul.f32 %v1257, 1.442695
      %v1265 = vpow.pop %v1264
      %v1266 = vsub.f32 %v1259, 1.0
      %v1267 = vsub.f32 %v1261, 1.0
      %v1268 = vsub.f32 %v1263, 1.0
      %v1269 = vsub.f32 %v1265, 1.0
      %v1270 = vsel %vm1250, %v1246, %v1266
      %v1271 = vsel %vm1251, %v1247, %v1267
      %v1272 = vsel %vm1252, %v1248, %v1268
      %v1273 = vsel %vm1253, %v1249, %v1269
      %v1274 = vpack.c.bf16 %v1270, %v1270
      %v1275 = vpack.c.bf16 %v1271, %v1271
      %v1276 = vpack.c.bf16 %v1272, %v1272
      %v1277 = vpack.c.bf16 %v1273, %v1273
      %1278 = vst.msk [vmem:[#allocation2 + $0x10] sm:$0xf] %vm280, %v1274
      %1279 = vst.msk [vmem:[#allocation2 + $0x14] sm:$0xf] %vm280, %v1275
      %1280 = vst.msk [vmem:[#allocation2 + $0x18] sm:$0xf] %vm280, %v1276
      %1281 = vst.msk [vmem:[#allocation2 + $0x1c] sm:$0xf] %vm280, %v1277
      %v1282 = vld [vmem:[#allocation2] sm:$0xf]
      %v1283 = vld [vmem:[#allocation2 + $0x4] sm:$0xf]
      %v1284 = vld [vmem:[#allocation2 + $0x8] sm:$0xf]
      %v1285 = vld [vmem:[#allocation2 + $0xc] sm:$0xf]
      %v1286 = vld [vmem:[#allocation2 + $0x10] sm:$0xf]
      %v1287 = vld [vmem:[#allocation2 + $0x14] sm:$0xf]
      %v1288 = vld [vmem:[#allocation2 + $0x18] sm:$0xf]
      %v1289 = vld [vmem:[#allocation2 + $0x1c] sm:$0xf]
      %v1290 = vld [vmem:[#allocation2 + $0x20] sm:$0xf]
      %v1291 = vld [vmem:[#allocation2 + $0x24] sm:$0xf]
      %v1292 = vld [vmem:[#allocation2 + $0x28] sm:$0xf]
      %v1293 = vld [vmem:[#allocation2 + $0x2c] sm:$0xf]
      %v1299 = vunpack.c.l.b16 %v1282
      %v1300 = vunpack.c.l.b16 %v1283
      %v1301 = vunpack.c.l.b16 %v1284
      %v1302 = vunpack.c.l.b16 %v1285
      %v1303 = vunpack.c.l.b16 %v1286
      %v1304 = vpack.c.b16 %v1300, %v1299
      %v1305 = vpack.c.b16 %v1302, %v1301
      %v1306 = vpack.c.b16 %v1303, %v1303
      %v1308 = vunpack.c.l.b16 %v1287
      %v1309 = vpack.c.b16 %v1301, %v1300
      %v1310 = vpack.c.b16 %v1303, %v1302
      %v1311 = vpack.c.b16 %v1308, %v1308
      %v1313 = vshrl.u32 %v1309, 16
      %v1315 = vshll.u32 %v1309, 16
      %v1317 = vrot.slane %v1315, 1
      %v1318 = vor.u32 %v1313, %v1317
      %v1320 = vshll.u32 %v1310, 16
      %v1322 = vrot.slane %v1320, 1
      %v1323 = vsel %vm346, %v1318, %v1322
      %v1324 = vshrl.u32 %v1310, 16
      %v1326 = vor.u32 %v1324, %v1322
      %v1328 = vshll.u32 %v1311, 16
      %v1330 = vrot.slane %v1328, 1
      %v1331 = vsel %vm346, %v1326, %v1330
      %v1332 = vshrl.u32 %v1311, 16
      %v1334 = vor.u32 %v1332, %v1330
      %1335 = vrot.lane.b32.xlu0 %v1323, 16
      %v1336 = vpop.permute.xlu0 %1335
      %1337 = vrot.lane.b32.xlu0 %v1331, 16
      %v1338 = vpop.permute.xlu0 %1337
      %1339 = vrot.lane.b32.xlu0 %v1334, 16
      %v1340 = vpop.permute.xlu0 %1339
      %v1342 = vunpack.c.l.b16 %v1288
      %v1343 = vpack.c.b16 %v1308, %v1303
      %v1344 = vpack.c.b16 %v1342, %v1342
      %v1345 = vrot.slane %v1305, 1
      %v1346 = vrot.slane %v1343, 1
      %v1347 = vsel %vm371, %v1345, %v1346
      %v1348 = vrot.slane %v1344, 1
      %v1349 = vsel %vm371, %v1346, %v1348
      %1350 = vrot.lane.b32.xlu0 %v1347, 32
      %v1351 = vpop.permute.xlu0 %1350
      %1352 = vrot.lane.b32.xlu0 %v1349, 32
      %v1353 = vpop.permute.xlu0 %1352
      %1354 = vrot.lane.b32.xlu0 %v1348, 32
      %v1355 = vpop.permute.xlu0 %1354
      %v1357 = vunpack.c.l.b16 %v1289
      %v1358 = vpack.c.b16 %v1357, %v1342
      %v1360 = vshrl.u32 %v1343, 16
      %v1362 = vrot.slane %v1360, 5
      %v1363 = vshll.u32 %v1343, 16
      %v1365 = vrot.slane %v1363, 6
      %v1366 = vor.u32 %v1362, %v1365
      %v1368 = vshrl.u32 %v1358, 16
      %v1370 = vrot.slane %v1368, 5
      %v1371 = vshll.u32 %v1358, 16
      %v1373 = vrot.slane %v1371, 6
      %v1374 = vor.u32 %v1370, %v1373
      %v1375 = vsel %vm567, %v1366, %v1374
      %1376 = vrot.lane.b32.xlu0 %v1366, 48
      %v1377 = vpop.permute.xlu0 %1376
      %1378 = vrot.lane.b32.xlu0 %v1375, 48
      %v1379 = vpop.permute.xlu0 %1378
      %1380 = vrot.lane.b32.xlu0 %v1374, 48
      %v1381 = vpop.permute.xlu0 %1380
      %v1384 = vunpack.c.l.b16 %v1290
      %v1385 = vunpack.c.l.b16 %v1291
      %v1386 = vpack.c.b16 %v1342, %v1308
      %v1387 = vpack.c.b16 %v1384, %v1357
      %v1388 = vpack.c.b16 %v1385, %v1385
      %v1389 = vrot.slane %v1386, 6
      %v1390 = vrot.slane %v1387, 6
      %v1391 = vsel %vm594, %v1389, %v1390
      %v1392 = vrot.slane %v1388, 6
      %v1393 = vsel %vm594, %v1390, %v1392
      %1394 = vrot.lane.b32.xlu0 %v1389, 64
      %v1395 = vpop.permute.xlu0 %1394
      %1396 = vrot.lane.b32.xlu0 %v1391, 64
      %v1397 = vpop.permute.xlu0 %1396
      %1398 = vrot.lane.b32.xlu0 %v1393, 64
      %v1399 = vpop.permute.xlu0 %1398
      %v1401 = vunpack.c.l.b16 %v1292
      %v1402 = vpack.c.b16 %v1385, %v1384
      %v1403 = vpack.c.b16 %v1401, %v1401
      %v1404 = vrot.slane %v1368, 6
      %v1405 = vrot.slane %v1371, 7
      %v1406 = vor.u32 %v1404, %v1405
      %v1408 = vshrl.u32 %v1402, 16
      %v1410 = vrot.slane %v1408, 6
      %v1411 = vshll.u32 %v1402, 16
      %v1413 = vrot.slane %v1411, 7
      %v1414 = vor.u32 %v1410, %v1413
      %v1415 = vsel %vm606, %v1406, %v1414
      %v1417 = vshrl.u32 %v1403, 16
      %v1419 = vrot.slane %v1417, 6
      %v1420 = vshll.u32 %v1403, 16
      %v1422 = vrot.slane %v1420, 7
      %v1423 = vor.u32 %v1419, %v1422
      %v1424 = vsel %vm606, %v1414, %v1423
      %1425 = vrot.lane.b32.xlu0 %v1406, 80
      %v1426 = vpop.permute.xlu0 %1425
      %1427 = vrot.lane.b32.xlu0 %v1415, 80
      %v1428 = vpop.permute.xlu0 %1427
      %1429 = vrot.lane.b32.xlu0 %v1424, 80
      %v1430 = vpop.permute.xlu0 %1429
      %v1432 = vunpack.c.l.b16 %v1293
      %v1433 = vpack.c.b16 %v1401, %v1385
      %v1434 = vpack.c.b16 %v1432, %v1432
      %v1435 = vrot.slane %v1387, 7
      %v1436 = vrot.slane %v1433, 7
      %v1437 = vsel %vm629, %v1435, %v1436
      %v1438 = vrot.slane %v1434, 7
      %v1439 = vsel %vm629, %v1436, %v1438
      %1440 = vrot.lane.b32.xlu0 %v1435, 96
      %v1441 = vpop.permute.xlu0 %1440
      %1442 = vrot.lane.b32.xlu0 %v1437, 96
      %v1443 = vpop.permute.xlu0 %1442
      %1444 = vrot.lane.b32.xlu0 %v1439, 96
      %v1445 = vpop.permute.xlu0 %1444
      %v1448 = vsel %vm399, %v1304, %v1336
      %v1451 = vsel %vm399, %v1305, %v1338
      %v1454 = vsel %vm399, %v1306, %v1340
      %v1456 = vsel %vm404, %v1448, %v1351
      %v1458 = vsel %vm404, %v1451, %v1353
      %v1460 = vsel %vm404, %v1454, %v1355
      %v1462 = vsel %vm409, %v1456, %v1377
      %v1464 = vsel %vm409, %v1458, %v1379
      %v1466 = vsel %vm409, %v1460, %v1381
      %v1468 = vsel %vm450, %v1462, %v1395
      %v1470 = vsel %vm450, %v1464, %v1397
      %v1472 = vsel %vm450, %v1466, %v1399
      %v1474 = vsel %vm665, %v1468, %v1426
      %v1476 = vsel %vm665, %v1470, %v1428
      %v1478 = vsel %vm665, %v1472, %v1430
      %v1480 = vsel %vm672, %v1474, %v1441
      %v1482 = vsel %vm672, %v1476, %v1443
      %v1484 = vsel %vm672, %v1478, %v1445
      %s1485 = scalar_lea.vmem %s3, 112
      %v1486 = vld [vmem:[%s1485] sm:$0xf]
      %v1487 = vld [vmem:[%s1485 + $0x4] sm:$0xf]
      %v1488 = vld [vmem:[%s1485 + $0x8] sm:$0xf]
      %v1489 = vld [vmem:[%s1485 + $0xc] sm:$0xf]
      %v1490 = vld [vmem:[%s1485 + $0x10] sm:$0xf]
      %v1491 = vld [vmem:[%s1485 + $0x14] sm:$0xf]
      %v1492 = vld [vmem:[%s1485 + $0x18] sm:$0xf]
      %v1493 = vld [vmem:[%s1485 + $0x1c] sm:$0xf]
      %v1494 = vld [vmem:[%s1485 + $0x20] sm:$0xf]
      %v1495 = vld [vmem:[%s1485 + $0x24] sm:$0xf]
      %v1496 = vld [vmem:[%s1485 + $0x28] sm:$0xf]
      %v1497 = vld [vmem:[%s1485 + $0x2c] sm:$0xf]
      %v1498 = vld [vmem:[%s1485 + $0x30] sm:$0xf]
      %v1499 = vld [vmem:[%s1485 + $0x34] sm:$0xf]
      %s1500 = scalar_lea.vmem %s4, 2
      %v1501 = vld [vmem:[%s1500] sm:$0x1]
      %v1503 = vperm.slane %v1501, 0
      %v1505 = vshrl.u32 %v1480, 16
      %v1507 = vrot.slane %v1505, 2
      %v1508 = vshll.u32 %v1480, 16
      %v1510 = vrot.slane %v1508, 3
      %v1511 = vor.u32 %v1507, %v1510
      %v1512 = vshrl.u32 %v1482, 16
      %v1514 = vrot.slane %v1512, 2
      %v1515 = vshll.u32 %v1482, 16
      %v1517 = vrot.slane %v1515, 3
      %v1518 = vor.u32 %v1514, %v1517
      %v1519 = vsel %vm697, %v1511, %v1518
      %v1520 = vshrl.u32 %v1484, 16
      %v1522 = vrot.slane %v1520, 2
      %v1523 = vshll.u32 %v1484, 16
      %v1525 = vrot.slane %v1523, 3
      %v1526 = vor.u32 %v1522, %v1525
      %v1527 = vsel %vm697, %v1518, %v1526
      %v1542 = vunpack.c.l.b16 %v1486
      %v1543 = vunpack.c.l.b16 %v1487
      %v1544 = vunpack.c.l.b16 %v1488
      %v1545 = vunpack.c.l.b16 %v1489
      %v1546 = vunpack.c.l.b16 %v1490
      %v1547 = vunpack.c.l.b16 %v1491
      %v1548 = vunpack.c.l.b16 %v1492
      %v1549 = vunpack.c.l.b16 %v1493
      %v1550 = vunpack.c.l.b16 %v1494
      %v1551 = vunpack.c.l.b16 %v1495
      %v1552 = vunpack.c.l.b16 %v1496
      %v1553 = vunpack.c.l.b16 %v1497
      %v1554 = vunpack.c.l.b16 %v1498
      %v1555 = vunpack.c.l.b16 %v1499
      %v1556 = vpack.c.b16 %v1543, %v1542
      %v1557 = vpack.c.b16 %v1545, %v1544
      %v1558 = vpack.c.b16 %v1547, %v1546
      %v1559 = vpack.c.b16 %v1549, %v1548
      %v1560 = vpack.c.b16 %v1551, %v1550
      %v1561 = vpack.c.b16 %v1553, %v1552
      %v1562 = vpack.c.b16 %v1555, %v1554
      %v1571 = vsel %vm763, %v1519, 0
      %v1574 = vsel %vm763, %v1527, 0
      %1576 = vmatpush.bf16.msra.mxu0 0
      %1577 = vmatpush.bf16.msra.mxu0 %v1562
      %1578 = vmatpush.bf16.msra.mxu0 %v1561
      %1579 = vmatpush.bf16.msra.mxu0 %v1560
      %1580 = vmatpush.bf16.msra.mxu0 %v1559
      %1581 = vmatpush.bf16.msra.mxu0 %v1558
      %1582 = vmatpush.bf16.msra.mxu0 %v1557
      %1583 = vmatpush.bf16.msra.mxu0 %v1556
      %1584 = vmatmul.bf16.gmra.mxu0 %v1571
      %v1585 = vpop.f32.mrf.mxu0
      %v1586 = vadd.f32 %v1503, %v1585
      %v1587 = vpop.f32.mrf.mxu0
      %v1588 = vadd.f32 %v1503, %v1587
      %1589 = vmatmul.bf16.gmra.mxu0 %v1574
      %v1590 = vpop.f32.mrf.mxu0
      %v1591 = vadd.f32 %v1503, %v1590
      %v1592 = vpop.f32.mrf.mxu0
      %v1593 = vadd.f32 %v1503, %v1592
      %1594 = vdwg.mxu0
      %vm1595 = vcmp.gt.f32.partialorder %v1586, 0.0
      %vm1596 = vcmp.gt.f32.partialorder %v1588, 0.0
      %vm1597 = vcmp.gt.f32.partialorder %v1591, 0.0
      %vm1598 = vcmp.gt.f32.partialorder %v1593, 0.0
      %v1599 = vmin.f32 %v1586, 0.0
      %v1600 = vmin.f32 %v1588, 0.0
      %v1601 = vmin.f32 %v1591, 0.0
      %v1602 = vmin.f32 %v1593, 0.0
      %v1603 = vmul.f32 %v1599, 1.442695
      %v1604 = vpow.pop %v1603
      %v1605 = vmul.f32 %v1600, 1.442695
      %v1606 = vpow.pop %v1605
      %v1607 = vmul.f32 %v1601, 1.442695
      %v1608 = vpow.pop %v1607
      %v1609 = vmul.f32 %v1602, 1.442695
      %v1610 = vpow.pop %v1609
      %v1611 = vsub.f32 %v1604, 1.0
      %v1612 = vsub.f32 %v1606, 1.0
      %v1613 = vsub.f32 %v1608, 1.0
      %v1614 = vsub.f32 %v1610, 1.0
      %v1615 = vsel %vm1595, %v1586, %v1611
      %v1616 = vsel %vm1596, %v1588, %v1612
      %v1617 = vsel %vm1597, %v1591, %v1613
      %v1618 = vsel %vm1598, %v1593, %v1614
      %v1619 = vpack.c.bf16 %v1616, %v1615
      %v1620 = vpack.c.bf16 %v1618, %v1617
      %s1621 = scalar_lea.vmem %s5, 16
      %v1622 = vld [vmem:[%s1621] sm:$0xf]
      %v1623 = vld [vmem:[%s1621 + $0x4] sm:$0xf]
      %s1624 = scalar_lea.vmem %s6, 2
      %v1625 = vld [vmem:[%s1624] sm:$0x1]
      %v1627 = vperm.slane %v1625, 0
      %v1631 = vunpack.c.l.b16 %v1622
      %v1632 = vunpack.c.l.b16 %v1623
      %v1633 = vpack.c.b16 %v1632, %v1631
      %v1636 = vsel %vm399, %v1619, 0
      %v1639 = vsel %vm399, %v1620, 0
      %1641 = vmatpush.bf16.msra.mxu0 0
      %1642 = vmatpush.bf16.msra.mxu0 0
      %1643 = vmatpush.bf16.msra.mxu0 0
      %1644 = vmatpush.bf16.msra.mxu0 0
      %1645 = vmatpush.bf16.msra.mxu0 0
      %1646 = vmatpush.bf16.msra.mxu0 0
      %1647 = vmatpush.bf16.msra.mxu0 0
      %1648 = vmatpush.bf16.msra.mxu0 %v1633
      %1649 = vmatmul.bf16.gmra.mxu0 %v1636
      %v1650 = vpop.f32.mrf.mxu0
      %v1651 = vadd.f32 %v1627, %v1650
      %v1652 = vpop.f32.mrf.mxu0
      %v1653 = vadd.f32 %v1627, %v1652
      %1654 = vmatmul.bf16.gmra.mxu0 %v1639
      %v1655 = vpop.f32.mrf.mxu0
      %v1656 = vadd.f32 %v1627, %v1655
      %v1657 = vpop.f32.mrf.mxu0
      %v1658 = vadd.f32 %v1627, %v1657
      %1659 = vdwg.mxu0
      %v1660 = vadd.f32 %v1651, %v1246
      %v1661 = vadd.f32 %v1653, %v1247
      %v1662 = vadd.f32 %v1656, %v1248
      %v1663 = vadd.f32 %v1658, %v1249
      %1664 = vst.msk [vmem:[%s278] sm:$0xff] %vm399, %v1660
      %1665 = vst.msk [vmem:[%s278 + $0x8] sm:$0xff] %vm399, %v1661
      %1666 = vst.msk [vmem:[%s278 + $0x10] sm:$0xff] %vm399, %v1662
      %1667 = vst.msk [vmem:[%s278 + $0x18] sm:$0xff] %vm399, %v1663
      %p1668 = scmp.lt.s32.totalorder %s18, 1
      %s1669 = scalar_select %p1668, %s18, 1
      %s1670 = smul.addr %s1669, 4
      %s1671 = smul.addr %s1670, 8
      %s1672 = scalar_lea.vmem %s7, %s1671
      // Predicated region
      $region49: #{tpu_custom_call.1} parent=47 // pred_check
        %p1673 = pneg %p188
      $region50: #{tpu_custom_call.1} parent=47 // pred_check_branch
        %1675 = sbr.rel (%p1673) target = $region52
      $region51: #{tpu_custom_call.1} parent=47 // pred_region
        _
      $region52: #{tpu_custom_call.1} parent=47 // pred_fallthru
        _
    $region48: #{tpu_custom_call.1} parent=5 // pred_fallthru
      _
    %p1676 = scmp.le.s32.totalorder 2, %s13
    // Predicated region
    $region53: #{tpu_custom_call.1} parent=5 // pred_check
      %p1677 = pneg %p1676
    $region54: #{tpu_custom_call.1} parent=5 // pred_check_branch
      %1679 = sbr.rel (%p1677) target = $region56
    $region55: #{tpu_custom_call.1} parent=5 // pred_region
      %s1680 = ssub.s32 %s13, 2
      // Predicated region
      $region57: #{tpu_custom_call.1} parent=55 // pred_check
        %p1681 = pneg %p194
      $region58: #{tpu_custom_call.1} parent=55 // pred_check_branch
        %1683 = sbr.rel (%p1681) target = $region60
      $region59: #{tpu_custom_call.1} parent=55 // pred_region
        %p1684 = scmp.lt.s32.totalorder %s19, 1
        %s1685 = scalar_select %p1684, %s19, 1
        %s1686 = smul.addr %s1685, 4
        %s1687 = smul.addr %s1686, 8
        %s1688 = scalar_lea.vmem %s7, %s1687
      $region60: #{tpu_custom_call.1} parent=55 // pred_fallthru
        _
    $region56: #{tpu_custom_call.1} parent=5 // pred_fallthru
      _
  $region6: #{tpu_custom_call.1} parent=0 // loop_footer
    %s17 = sadd.s32 1, %s13
  $region7: #{tpu_custom_call.1} parent=0 // loop_footer_branch
    %12 = sbr.rel target = $region3
  $region8: #{tpu_custom_call.1} parent=0 // loop_exit
    _

</llo_original>
